<compile_context>
chip_gen: v7x
topology: tpu7x:2x2x1
jax: 0.10.0
libtpu: 0.0.40
codegen_flags: <defaults>
</compile_context>

<pallas_src>
import math
import functools

import jax
import jax.numpy as jnp
from jax.experimental import pallas as pl
from jax.experimental.pallas import tpu as pltpu


def _round_up(x, m):
    return (x + m - 1) // m * m


def _pad_latent(latent_dim, num_heads):
    # smallest lat_pad >= latent_dim such that num_heads * lat_pad % 128 == 0
    step = 128 // math.gcd(num_heads, 128)
    return _round_up(latent_dim, step)


# ----------------------------- fused Pallas kernel -----------------------------

def fused_transformer_kernel(h0_ref, wqkv_ref, bqkv_ref, wo_ref, bo_ref,
                             wfc_ref, bfc_ref, out_ref, h_scr,
                             *, num_layers, num_heads, lat_pad, scale):
    """Grid = (row_tiles, num_layers + vocab_tiles).

    h0_ref:   (tm, E_pad)           f32   summaries + pos-enc + level bias
    wqkv_ref: (1, E_pad, 3*hlp)     bf16  layer t's packed Q|K|V weights
    bqkv_ref: (1, 1, 3*hlp)         f32
    wo_ref:   (1, hlp, E_pad)       bf16
    bo_ref:   (1, 1, E_pad)         f32
    wfc_ref:  (E_pad, tn)           bf16  vocab tile (t - num_layers)
    bfc_ref:  (1, tn)               f32
    out_ref:  (tm, tn)              f32
    h_scr:    (tm, E_pad)           f32   persistent activation tile
    """
    t = pl.program_id(1)
    tm = h_scr.shape[0]
    hlp = num_heads * lat_pad

    @pl.when(t == 0)
    def _init():
        h_scr[...] = h0_ref[...]

    @pl.when(t < num_layers)
    def _layer():
        hb = h_scr[...].astype(jnp.bfloat16)
        qkv = (jnp.dot(hb, wqkv_ref[0], preferred_element_type=jnp.float32)
               + bqkv_ref[0])                                     # (tm, 3*hlp) f32
        q3 = qkv[:, 0 * hlp:1 * hlp].reshape(tm, num_heads, lat_pad)
        k3 = qkv[:, 1 * hlp:2 * hlp].reshape(tm, num_heads, lat_pad)
        v3 = qkv[:, 2 * hlp:3 * hlp].reshape(tm, num_heads, lat_pad)

        # This module attends over HEADS at each (batch, chunk) position.
        # Batched (over rows) head-vs-head matmuls on the MXU; padded latent
        # lanes are zero in q/k/v so they do not perturb the math.
        scores = jnp.einsum("mhl,mgl->mhg", q3, k3,
                            preferred_element_type=jnp.float32) * scale  # (tm,H,H)
        attn_w = jax.nn.softmax(scores, axis=-1)
        ctx = jnp.einsum("mhg,mgl->mhl", attn_w, v3,
                         preferred_element_type=jnp.float32)             # (tm,H,Lp)
        attn = ctx.reshape(tm, hlp).astype(jnp.bfloat16)
        h_scr[...] = (jnp.dot(attn, wo_ref[0], preferred_element_type=jnp.float32)
                      + bo_ref[0])

    @pl.when(t >= num_layers)
    def _fc_out():
        hb = h_scr[...].astype(jnp.bfloat16)
        out_ref[...] = (jnp.dot(hb, wfc_ref[...], preferred_element_type=jnp.float32)
                        + bfc_ref[...])


# ----------------------------- wrapper / model glue -----------------------------

def make_pos_enc(max_length, embedding_dim):
    position = jnp.arange(max_length, dtype=jnp.float32)[:, None]
    div_term = jnp.exp(jnp.arange(0, embedding_dim, 2, dtype=jnp.float32)
                       * (-math.log(10000.0) / embedding_dim))
    pe = jnp.zeros((max_length, embedding_dim), jnp.float32)
    pe = pe.at[:, 0::2].set(jnp.sin(position * div_term))
    pe = pe.at[:, 1::2].set(jnp.cos(position * div_term))
    return pe


def init_params(key, vocab_size, embedding_dim, num_layers, num_heads,
                hierarchy_levels):
    latent_dim = embedding_dim // 2
    hl = num_heads * latent_dim
    keys = jax.random.split(key, 4 + 8 * num_layers)
    p = {
        "embedding": jax.random.normal(keys[0], (vocab_size, embedding_dim),
                                       jnp.float32) * 0.02,
        "summary_embeddings": jax.random.normal(
            keys[1], (hierarchy_levels, embedding_dim), jnp.float32) * 0.02,
        "fc_out_w": jax.random.normal(keys[2], (vocab_size, embedding_dim),
                                      jnp.float32) * 0.02,
        "fc_out_b": jax.random.normal(keys[3], (vocab_size,), jnp.float32) * 0.02,
        "layers": [],
    }
    for l in range(num_layers):
        k = keys[4 + 8 * l: 4 + 8 * (l + 1)]
        p["layers"].append({
            "W_q": jax.random.normal(k[0], (hl, embedding_dim), jnp.float32) * 0.05,
            "b_q": jax.random.normal(k[1], (hl,), jnp.float32) * 0.05,
            "W_k": jax.random.normal(k[2], (hl, embedding_dim), jnp.float32) * 0.05,
            "b_k": jax.random.normal(k[3], (hl,), jnp.float32) * 0.05,
            "W_v": jax.random.normal(k[4], (hl, embedding_dim), jnp.float32) * 0.05,
            "b_v": jax.random.normal(k[5], (hl,), jnp.float32) * 0.05,
            "W_o": jax.random.normal(k[6], (embedding_dim, hl), jnp.float32) * 0.05,
            "b_o": jax.random.normal(k[7], (embedding_dim,), jnp.float32) * 0.05,
        })
    return p


def transformer_forward(params, src, *, chunk_size, num_heads, level=0):
    B, S = src.shape
    E = params["embedding"].shape[1]
    V = params["fc_out_w"].shape[0]
    latent_dim = E // 2
    num_layers = len(params["layers"])

    assert S % chunk_size == 0, "seq_len must be a multiple of chunk_size"
    C = S // chunk_size
    assert C <= 1024, "positional encoding table is capped at 1024 chunks"

    # --- XLA glue (gather + chunk mean + Fourier/level bias): tiny, fused by XLA.
    tok = jnp.take(params["embedding"], src, axis=0)                # (B, S, E)
    summaries = tok.reshape(B, C, chunk_size, E).mean(axis=2)       # (B, C, E)
    h0 = (summaries + make_pos_enc(1024, E)[:C][None]
          + params["summary_embeddings"][level][None, None])        # (B, C, E)

    # --- padded / tiled geometry -------------------------------------------------
    M = B * C
    E_pad = _round_up(E, 128)
    lat_pad = _pad_latent(latent_dim, num_heads)
    hlp = num_heads * lat_pad                                       # multiple of 128
    V_pad = _round_up(V, 128)
    tn = next(t for t in (512, 256, 128) if V_pad % t == 0)         # vocab tile
    num_v_tiles = V_pad // tn

    tm = min(256, _round_up(M, 8))
    if _round_up(M, 8) >= 16 and _round_up(M, 8) <= tm:
        tm = _round_up(_round_up(M, 8) // 2, 8)      # >=2 row tiles for 2-TC chips
    M_pad = _round_up(M, tm)
    num_row_tiles = M_pad // tm

    def pad_to(x, shape):
        out = jnp.zeros(shape, x.dtype)
        return out.at[tuple(slice(0, s) for s in x.shape)].set(x)

    h0_p = pad_to(h0.reshape(M, E), (M_pad, E_pad))

    # --- one-time weight repack: pre-transposed (in, out), latent padded per head,
    #     bf16 for the MXU; biases stay f32.
    def qkv_weight(w):                               # torch layout (hl, E)
        wt = w.T.reshape(E, num_heads, latent_dim)
        wt = pad_to(wt, (E_pad, num_heads, lat_pad))
        return wt.reshape(E_pad, hlp)

    def qkv_bias(b):                                 # (hl,)
        bb = pad_to(b.reshape(num_heads, latent_dim), (num_heads, lat_pad))
        return bb.reshape(1, hlp)

    def o_weight(w):                                 # torch layout (E, hl)
        wt = w.T.reshape(num_heads, latent_dim, E)
        wt = pad_to(wt, (num_heads, lat_pad, E_pad))
        return wt.reshape(hlp, E_pad)

    layers = params["layers"]
    wqkv = jnp.stack([
        jnp.concatenate([qkv_weight(lp["W_q"]), qkv_weight(lp["W_k"]),
                         qkv_weight(lp["W_v"])], axis=1)
        for lp in layers]).astype(jnp.bfloat16)                     # (L, E_pad, 3*hlp)
    bqkv = jnp.stack([
        jnp.concatenate([qkv_bias(lp["b_q"]), qkv_bias(lp["b_k"]),
                         qkv_bias(lp["b_v"])], axis=1)
        for lp in layers])                                          # (L, 1, 3*hlp)
    wo = jnp.stack([o_weight(lp["W_o"]) for lp in layers]).astype(jnp.bfloat16)
    bo = jnp.stack([pad_to(lp["b_o"][None, :], (1, E_pad)) for lp in layers])
    wfc = pad_to(params["fc_out_w"].T, (E_pad, V_pad)).astype(jnp.bfloat16)
    bfc = pad_to(params["fc_out_b"][None, :], (1, V_pad))

    # --- grid & specs: t-axis = num_layers layer steps then num_v_tiles fc steps.
    L = num_layers
    T = L + num_v_tiles
    layer_idx = lambda i, t: (jnp.minimum(t, L - 1), 0, 0)
    vocab_idx = lambda i, t: (0, jnp.maximum(t - L, 0))

    kern = functools.partial(fused_transformer_kernel,
                             num_layers=L, num_heads=num_heads,
                             lat_pad=lat_pad, scale=1.0 / math.sqrt(latent_dim))

    # VMEM budget (double-buffered blocks + scratch), clamped to v7x's 64 MiB.
    vmem_need = (2 * tm * E_pad * 4
                 + 2 * (E_pad * 3 * hlp + hlp * E_pad) * 2
                 + 2 * (3 * hlp + E_pad) * 4
                 + 2 * (E_pad * tn * 2 + tn * 4)
                 + 2 * tm * tn * 4
                 + tm * E_pad * 4)
    vmem_limit = int(min(64 * 2**20, max(2 * vmem_need, 32 * 2**20)))

    out_p = pl.pallas_call(
        kern,
        out_shape=jax.ShapeDtypeStruct((M_pad, V_pad), jnp.float32),
        grid=(num_row_tiles, T),
        in_specs=[
            pl.BlockSpec((tm, E_pad), lambda i, t: (i, 0)),          # h0
            pl.BlockSpec((1, E_pad, 3 * hlp), layer_idx),            # Wqkv (streamed)
            pl.BlockSpec((1, 1, 3 * hlp), layer_idx),                # bqkv
            pl.BlockSpec((1, hlp, E_pad), layer_idx),                # Wo   (streamed)
            pl.BlockSpec((1, 1, E_pad), layer_idx),                  # bo
            pl.BlockSpec((E_pad, tn), vocab_idx),                    # Wfc  (V-tiled)
            pl.BlockSpec((1, tn), vocab_idx),                        # bfc
        ],
        out_specs=pl.BlockSpec((tm, tn), lambda i, t: (i, jnp.maximum(t - L, 0))),
        scratch_shapes=[pltpu.VMEM((tm, E_pad), jnp.float32)],
        compiler_params=pltpu.CompilerParams(
            dimension_semantics=("parallel", "arbitrary"),
            vmem_limit_bytes=vmem_limit),
    )(h0_p, wqkv, bqkv, wo, bo, wfc, bfc)

    return out_p[:M, :V].reshape(B, C, V)


# ----------------------------- pure-JAX reference -----------------------------

def reference_forward(params, src, *, chunk_size, num_heads, level=0):
    B, S = src.shape
    E = params["embedding"].shape[1]
    L = E // 2
    tok = jnp.take(params["embedding"], src, axis=0)
    C = S // chunk_size
    h = tok.reshape(B, C, chunk_size, E).mean(axis=2)
    h = (h + make_pos_enc(1024, E)[:C][None]
         + params["summary_embeddings"][level][None, None])
    for lp in params["layers"]:
        q = h @ lp["W_q"].T + lp["b_q"]
        k = h @ lp["W_k"].T + lp["b_k"]
        v = h @ lp["W_v"].T + lp["b_v"]
        q4 = q.reshape(B, C, num_heads, L)
        k4 = k.reshape(B, C, num_heads, L)
        v4 = v.reshape(B, C, num_heads, L)
        s = jnp.einsum("bcil,bcjl->bcij", q4, k4) / math.sqrt(L)
        w = jax.nn.softmax(s, axis=-1)
        o = jnp.einsum("bcij,bcjl->bcil", w, v4).reshape(B, C, num_heads * L)
        h = o @ lp["W_o"].T + lp["b_o"]
    return h @ params["fc_out_w"].T + params["fc_out_b"]


if __name__ == "__main__":
    vocab_size = 64
    embedding_dim = 32
    num_layers = 2
    num_heads = 4
    chunk_size = 4
    seq_len = 16          # -> 4 chunks
    batch = 2
    hierarchy_levels = 3

    key = jax.random.PRNGKey(0)
    pkey, dkey = jax.random.split(key)
    params = init_params(pkey, vocab_size, embedding_dim, num_layers, num_heads,
                         hierarchy_levels)
    src = jax.random.randint(dkey, (batch, seq_len), 0, vocab_size, jnp.int32)

    out = transformer_forward(params, src, chunk_size=chunk_size,
                              num_heads=num_heads, level=0)
    out = jax.block_until_ready(out)

    with jax.default_matmul_precision("highest"):
        ref = reference_forward(params, src, chunk_size=chunk_size,
                                num_heads=num_heads, level=0)
        ref = jax.block_until_ready(ref)

    assert out.shape == (batch, seq_len // chunk_size, vocab_size)
    # bf16 weights in the kernel vs. f32 reference -> loosened tolerance.
    assert jnp.allclose(out, ref, atol=2e-2, rtol=2e-2), (
        "mismatch vs reference; max abs diff = %f"
        % float(jnp.max(jnp.abs(out - ref))))

    print("KERNEL_OK")
</pallas_src>

<mosaic_0001>
module attributes {stable_mosaic.version = 11 : i64} {
  func.func @fused_transformer_kernel(%arg0: i32, %arg1: i32, %arg2: memref<8x128xf32, #tpu.memory_space<vmem>>, %arg3: memref<1x128x384xbf16, #tpu.memory_space<vmem>>, %arg4: memref<1x1x384xf32, #tpu.memory_space<vmem>>, %arg5: memref<1x128x128xbf16, #tpu.memory_space<vmem>>, %arg6: memref<1x1x128xf32, #tpu.memory_space<vmem>>, %arg7: memref<128x128xbf16, #tpu.memory_space<vmem>>, %arg8: memref<1x128xf32, #tpu.memory_space<vmem>>, %arg9: memref<8x128xf32, #tpu.memory_space<vmem>>, %arg10: memref<8x128xf32, #tpu.memory_space<vmem>>) attributes {dimension_semantics = [#tpu.dimension_semantics<parallel>, #tpu.dimension_semantics<arbitrary>], iteration_bounds = array<i64: 1, 3>, scalar_prefetch = 0 : i64, scratch_operands = 1 : i64, tpu.core_type = #tpu.core_type<tc>, window_params = [{transform_indices = @transform_0, window_bounds = array<i64: 8, 128>}, {transform_indices = @transform_1, window_bounds = array<i64: 1, 128, 384>}, {transform_indices = @transform_2, window_bounds = array<i64: 1, 1, 384>}, {transform_indices = @transform_3, window_bounds = array<i64: 1, 128, 128>}, {transform_indices = @transform_4, window_bounds = array<i64: 1, 1, 128>}, {transform_indices = @transform_5, window_bounds = array<i64: 128, 128>}, {transform_indices = @transform_6, window_bounds = array<i64: 1, 128>}, {transform_indices = @transform_7, window_bounds = array<i64: 8, 128>}]} {
    %c0_i32 = arith.constant 0 : i32
    %0 = arith.cmpi eq, %arg1, %c0_i32 : i32
    %1 = arith.extui %0 : i1 to i32
    %c0_i32_0 = arith.constant 0 : i32
    %2 = arith.cmpi ne, %1, %c0_i32_0 : i32
    scf.if %2 {
      %c0 = arith.constant 0 : index
      %c0_4 = arith.constant 0 : index
      %9 = vector.load %arg2[%c0, %c0_4] : memref<8x128xf32, #tpu.memory_space<vmem>>, vector<8x128xf32>
      %c0_5 = arith.constant 0 : index
      %c0_6 = arith.constant 0 : index
      %10 = vector.load %arg10[%c0_5, %c0_6] : memref<8x128xf32, #tpu.memory_space<vmem>>, vector<8x128xf32>
      tpu.vector_store %arg10[%c0_5, %c0_6], %9 {strides = array<i32>} : memref<8x128xf32, #tpu.memory_space<vmem>>, vector<8x128xf32>,
    } else {
    }
    %c2_i32 = arith.constant 2 : i32
    %3 = arith.cmpi slt, %arg1, %c2_i32 : i32
    %4 = arith.extui %3 : i1 to i32
    %c0_i32_1 = arith.constant 0 : i32
    %5 = arith.cmpi ne, %4, %c0_i32_1 : i32
    scf.if %5 {
      %c0 = arith.constant 0 : index
      %c0_4 = arith.constant 0 : index
      %9 = vector.load %arg10[%c0, %c0_4] : memref<8x128xf32, #tpu.memory_space<vmem>>, vector<8x128xf32>
      %10 = arith.truncf %9 : vector<8x128xf32> to vector<8x128xbf16>
      %c0_5 = arith.constant 0 : index
      %c0_6 = arith.constant 0 : index
      %c0_7 = arith.constant 0 : index
      %11 = vector.load %arg3[%c0_5, %c0_6, %c0_7] : memref<1x128x384xbf16, #tpu.memory_space<vmem>>, vector<1x128x384xbf16>
      %12 = vector.shape_cast %11 : vector<1x128x384xbf16> to vector<128x384xbf16>
      %cst = arith.constant dense<0.000000e+00> : vector<8x384xf32>
      %13 = tpu.matmul %10, %12, %cst {dimension_numbers = #tpu.dot_dimension_numbers<[1], [0], [0], [1], [0, 0, 1, 1], [], []>} : vector<8x128xbf16>, vector<128x384xbf16>, vector<8x384xf32> -> vector<8x384xf32>
      %c0_8 = arith.constant 0 : index
      %c0_9 = arith.constant 0 : index
      %c0_10 = arith.constant 0 : index
      %14 = vector.load %arg4[%c0_8, %c0_9, %c0_10] : memref<1x1x384xf32, #tpu.memory_space<vmem>>, vector<1x1x384xf32>
      %15 = vector.shape_cast %14 : vector<1x1x384xf32> to vector<1x384xf32>
      %16 = vector.broadcast %15 : vector<1x384xf32> to vector<8x384xf32>
      %17 = arith.addf %13, %16 : vector<8x384xf32>
      %18 = vector.extract_strided_slice %17 {offsets = [0, 0], sizes = [8, 128], strides = [1, 1]} : vector<8x384xf32> to vector<8x128xf32>
      %19 = vector.shape_cast %18 : vector<8x128xf32> to vector<8x4x32xf32>
      %20 = vector.extract_strided_slice %17 {offsets = [0, 128], sizes = [8, 128], strides = [1, 1]} : vector<8x384xf32> to vector<8x128xf32>
      %21 = vector.shape_cast %20 : vector<8x128xf32> to vector<8x4x32xf32>
      %22 = vector.extract_strided_slice %17 {offsets = [0, 256], sizes = [8, 128], strides = [1, 1]} : vector<8x384xf32> to vector<8x128xf32>
      %23 = vector.shape_cast %22 : vector<8x128xf32> to vector<8x4x32xf32>
      "tpu.trace_start"() <{level = 10 : i32, message = "mhl,mgl->mhg"}> : () -> ()
      %cst_11 = arith.constant dense<0.000000e+00> : vector<8x4x4xf32>
      %24 = tpu.matmul %19, %21, %cst_11 {dimension_numbers = #tpu.dot_dimension_numbers<[2], [2], [1], [1], [0, 0, 0, 1, 1, 1], [0], [0]>} : vector<8x4x32xf32>, vector<8x4x32xf32>, vector<8x4x4xf32> -> vector<8x4x4xf32>
      "tpu.trace_stop"() : () -> ()
      %cst_12 = arith.constant 2.500000e-01 : f32
      %25 = vector.broadcast %cst_12 : f32 to vector<8x4x4xf32>
      %26 = arith.mulf %24, %25 : vector<8x4x4xf32>
      %cst_13 = arith.constant dense<0xFF800000> : vector<8x4xf32>
      %27 = vector.multi_reduction <maximumf>, %26, %cst_13 [2] : vector<8x4x4xf32> to vector<8x4xf32>
      %cst_14 = arith.constant 0xFF800000 : f32
      %28 = vector.broadcast %cst_14 : f32 to vector<8x4xf32>
      %29 = arith.maximumf %28, %27 : vector<8x4xf32>
      %30 = vector.shape_cast %29 : vector<8x4xf32> to vector<8x4x1xf32>
      %31 = vector.broadcast %30 : vector<8x4x1xf32> to vector<8x4x4xf32>
      %32 = arith.subf %26, %31 : vector<8x4x4xf32>
      %33 = math.exp %32 : vector<8x4x4xf32>
      %cst_15 = arith.constant dense<0.000000e+00> : vector<8x4xf32>
      %34 = vector.multi_reduction <add>, %33, %cst_15 [2] : vector<8x4x4xf32> to vector<8x4xf32>
      %35 = vector.shape_cast %34 : vector<8x4xf32> to vector<8x4x1xf32>
      %36 = vector.broadcast %35 : vector<8x4x1xf32> to vector<8x4x4xf32>
      %37 = arith.divf %33, %36 : vector<8x4x4xf32>
      "tpu.trace_start"() <{level = 10 : i32, message = "mhg,mgl->mhl"}> : () -> ()
      %cst_16 = arith.constant dense<0.000000e+00> : vector<8x4x32xf32>
      %38 = tpu.matmul %37, %23, %cst_16 {dimension_numbers = #tpu.dot_dimension_numbers<[2], [1], [1], [2], [0, 0, 0, 1, 1, 2], [0], [0]>} : vector<8x4x4xf32>, vector<8x4x32xf32>, vector<8x4x32xf32> -> vector<8x4x32xf32>
      "tpu.trace_stop"() : () -> ()
      %39 = vector.shape_cast %38 : vector<8x4x32xf32> to vector<8x128xf32>
      %40 = arith.truncf %39 : vector<8x128xf32> to vector<8x128xbf16>
      %c0_17 = arith.constant 0 : index
      %c0_18 = arith.constant 0 : index
      %c0_19 = arith.constant 0 : index
      %41 = vector.load %arg5[%c0_17, %c0_18, %c0_19] : memref<1x128x128xbf16, #tpu.memory_space<vmem>>, vector<1x128x128xbf16>
      %42 = vector.shape_cast %41 : vector<1x128x128xbf16> to vector<128x128xbf16>
      %cst_20 = arith.constant dense<0.000000e+00> : vector<8x128xf32>
      %43 = tpu.matmul %40, %42, %cst_20 {dimension_numbers = #tpu.dot_dimension_numbers<[1], [0], [0], [1], [0, 0, 1, 1], [], []>} : vector<8x128xbf16>, vector<128x128xbf16>, vector<8x128xf32> -> vector<8x128xf32>
      %c0_21 = arith.constant 0 : index
      %c0_22 = arith.constant 0 : index
      %c0_23 = arith.constant 0 : index
      %44 = vector.load %arg6[%c0_21, %c0_22, %c0_23] : memref<1x1x128xf32, #tpu.memory_space<vmem>>, vector<1x1x128xf32>
      %45 = vector.shape_cast %44 : vector<1x1x128xf32> to vector<1x128xf32>
      %46 = vector.broadcast %45 : vector<1x128xf32> to vector<8x128xf32>
      %47 = arith.addf %43, %46 : vector<8x128xf32>
      %c0_24 = arith.constant 0 : index
      %c0_25 = arith.constant 0 : index
      %48 = vector.load %arg10[%c0_24, %c0_25] : memref<8x128xf32, #tpu.memory_space<vmem>>, vector<8x128xf32>
      tpu.vector_store %arg10[%c0_24, %c0_25], %47 {strides = array<i32>} : memref<8x128xf32, #tpu.memory_space<vmem>>, vector<8x128xf32>,
    } else {
    }
    %c2_i32_2 = arith.constant 2 : i32
    %6 = arith.cmpi sge, %arg1, %c2_i32_2 : i32
    %7 = arith.extui %6 : i1 to i32
    %c0_i32_3 = arith.constant 0 : i32
    %8 = arith.cmpi ne, %7, %c0_i32_3 : i32
    scf.if %8 {
      %c0 = arith.constant 0 : index
      %c0_4 = arith.constant 0 : index
      %9 = vector.load %arg10[%c0, %c0_4] : memref<8x128xf32, #tpu.memory_space<vmem>>, vector<8x128xf32>
      %10 = arith.truncf %9 : vector<8x128xf32> to vector<8x128xbf16>
      %c0_5 = arith.constant 0 : index
      %c0_6 = arith.constant 0 : index
      %11 = vector.load %arg7[%c0_5, %c0_6] : memref<128x128xbf16, #tpu.memory_space<vmem>>, vector<128x128xbf16>
      %cst = arith.constant dense<0.000000e+00> : vector<8x128xf32>
      %12 = tpu.matmul %10, %11, %cst {dimension_numbers = #tpu.dot_dimension_numbers<[1], [0], [0], [1], [0, 0, 1, 1], [], []>} : vector<8x128xbf16>, vector<128x128xbf16>, vector<8x128xf32> -> vector<8x128xf32>
      %c0_7 = arith.constant 0 : index
      %c0_8 = arith.constant 0 : index
      %13 = vector.load %arg8[%c0_7, %c0_8] : memref<1x128xf32, #tpu.memory_space<vmem>>, vector<1x128xf32>
      %14 = vector.broadcast %13 : vector<1x128xf32> to vector<8x128xf32>
      %15 = arith.addf %12, %14 : vector<8x128xf32>
      %c0_9 = arith.constant 0 : index
      %c0_10 = arith.constant 0 : index
      %16 = vector.load %arg9[%c0_9, %c0_10] : memref<8x128xf32, #tpu.memory_space<vmem>>, vector<8x128xf32>
      tpu.vector_store %arg9[%c0_9, %c0_10], %15 {strides = array<i32>} : memref<8x128xf32, #tpu.memory_space<vmem>>, vector<8x128xf32>,
    } else {
    }
    return
  }
  func.func @transform_0(%arg0: i32, %arg1: i32) -> (i32, i32) {
    %c0_i32 = arith.constant 0 : i32
    %c0_i32_0 = arith.constant 0 : i32
    return %arg0, %c0_i32 : i32, i32
  }
  func.func @transform_1(%arg0: i32, %arg1: i32) -> (i32, i32, i32) {
    %c1_i32 = arith.constant 1 : i32
    %0 = arith.minsi %arg1, %c1_i32 : i32
    %c0_i32 = arith.constant 0 : i32
    %c0_i32_0 = arith.constant 0 : i32
    %c0_i32_1 = arith.constant 0 : i32
    return %0, %c0_i32, %c0_i32_0 : i32, i32, i32
  }
  func.func @transform_2(%arg0: i32, %arg1: i32) -> (i32, i32, i32) {
    %c1_i32 = arith.constant 1 : i32
    %0 = arith.minsi %arg1, %c1_i32 : i32
    %c0_i32 = arith.constant 0 : i32
    %c0_i32_0 = arith.constant 0 : i32
    %c0_i32_1 = arith.constant 0 : i32
    return %0, %c0_i32, %c0_i32_0 : i32, i32, i32
  }
  func.func @transform_3(%arg0: i32, %arg1: i32) -> (i32, i32, i32) {
    %c1_i32 = arith.constant 1 : i32
    %0 = arith.minsi %arg1, %c1_i32 : i32
    %c0_i32 = arith.constant 0 : i32
    %c0_i32_0 = arith.constant 0 : i32
    %c0_i32_1 = arith.constant 0 : i32
    return %0, %c0_i32, %c0_i32_0 : i32, i32, i32
  }
  func.func @transform_4(%arg0: i32, %arg1: i32) -> (i32, i32, i32) {
    %c1_i32 = arith.constant 1 : i32
    %0 = arith.minsi %arg1, %c1_i32 : i32
    %c0_i32 = arith.constant 0 : i32
    %c0_i32_0 = arith.constant 0 : i32
    %c0_i32_1 = arith.constant 0 : i32
    return %0, %c0_i32, %c0_i32_0 : i32, i32, i32
  }
  func.func @transform_5(%arg0: i32, %arg1: i32) -> (i32, i32) {
    %c2_i32 = arith.constant 2 : i32
    %0 = arith.subi %arg1, %c2_i32 : i32
    %c0_i32 = arith.constant 0 : i32
    %1 = arith.maxsi %0, %c0_i32 : i32
    %c0_i32_0 = arith.constant 0 : i32
    %c0_i32_1 = arith.constant 0 : i32
    return %c0_i32_0, %1 : i32, i32
  }
  func.func @transform_6(%arg0: i32, %arg1: i32) -> (i32, i32) {
    %c2_i32 = arith.constant 2 : i32
    %0 = arith.subi %arg1, %c2_i32 : i32
    %c0_i32 = arith.constant 0 : i32
    %1 = arith.maxsi %0, %c0_i32 : i32
    %c0_i32_0 = arith.constant 0 : i32
    %c0_i32_1 = arith.constant 0 : i32
    return %c0_i32_0, %1 : i32, i32
  }
  func.func @transform_7(%arg0: i32, %arg1: i32) -> (i32, i32) {
    %c2_i32 = arith.constant 2 : i32
    %0 = arith.subi %arg1, %c2_i32 : i32
    %c0_i32 = arith.constant 0 : i32
    %1 = arith.maxsi %0, %c0_i32 : i32
    %c0_i32_0 = arith.constant 0 : i32
    return %arg0, %1 : i32, i32
  }
}

</mosaic_0001>

<llo_original>
// kernel: tpu_custom_call.1
$region0: #{tpu_custom_call.1}
  #allocation0 [shape = 'u32[]', space=smem, size = 0x4, offset = 0x4, fixed_abs, tag = 'smem constant byte address 0x4 - core index']
  #allocation1 [shape = 'u32[144,128]{1,0:T(1,128)}', space=vmem, size = 0x12000, scoped, tag = 'internal scratch']
  #allocation2 [shape = 'f32[8,128]{1,0:T(8,128)}', space=vmem, size = 0x1000, scoped, tag = 'scratch operand']
  %s0 = inlined_call_operand.hbm [shape: f32[8,128], index: 0, kind: input, shape index: {}]
  %s1 = inlined_call_operand.hbm [shape: bf16[2,128,384], index: 1, kind: input, shape index: {}]
  %s2 = inlined_call_operand.vmem [shape: f32[2,1,384], index: 2, kind: input, shape index: {}]
  %s3 = inlined_call_operand.hbm [shape: bf16[2,128,128], index: 3, kind: input, shape index: {}]
  %s4 = inlined_call_operand.vmem [shape: f32[2,1,128], index: 4, kind: input, shape index: {}]
  %s5 = inlined_call_operand.hbm [shape: bf16[128,128], index: 5, kind: input, shape index: {}]
  %s6 = inlined_call_operand.vmem [shape: f32[1,128], index: 6, kind: input, shape index: {}]
  %s7 = inlined_call_operand.hbm [shape: f32[8,128], index: 7, kind: output, shape index: {}]
  %s8 = sld [smem:[#allocation0]]
  $region89: #{tpu_custom_call.1} parent=0
    _
  %s10 = ssub.s32 1, %s8
  %s11 = scalar_select 0, %s10, %s8
  $region1: #{tpu_custom_call.1} parent=0
    #allocation3 [shape = 'u8[4096]{0}', space=vmem, size = 0x1000, scoped, tag = 'input window, operand 0, single buffered']
    #allocation4 [shape = 's32[2]{0}', space=sflag, size = 0x8, scoped, tag = 'scoped memory for tpu_custom_call.1']
    #allocation5 [shape = 's32[2]{0}', space=sflag, size = 0x8, scoped, tag = 'scoped memory for tpu_custom_call.1']
    #allocation6 [shape = 'u8[196608]{0}', space=vmem, size = 0x30000, scoped, tag = 'input window, operand 1']
    #allocation7 [shape = 's32[2]{0}', space=sflag, size = 0x8, scoped, tag = 'scoped memory for tpu_custom_call.1']
    #allocation8 [shape = 'u8[65536]{0}', space=vmem, size = 0x10000, scoped, tag = 'input window, operand 3']
    #allocation9 [shape = 'u8[65536]{0}', space=vmem, size = 0x10000, scoped, tag = 'input window, operand 5']
    #allocation10 [shape = 's32[2]{0}', space=sflag, size = 0x8, scoped, tag = 'scoped memory for tpu_custom_call.1']
    #allocation11 [shape = 'u8[8192]{0}', space=vmem, size = 0x2000, scoped, tag = 'output window, operand 0']
    %12 = vsyncpa [#allocation4], 0
    %13 = vsyncpa [#allocation7], 0
    %s14 = scalar_lea.sflag [#allocation7], 1
    %15 = vsyncpa %s14, 0
    %16 = vsyncpa [#allocation10], 0
    %s17 = scalar_lea.sflag [#allocation10], 1
    %18 = vsyncpa %s17, 0
    %19 = vsyncpa [#allocation5], 0
    %s20 = scalar_lea.sflag [#allocation5], 1
    %21 = vsyncpa %s20, 0
    loop: start=0, step=1, limit=5
    $region2: #{tpu_custom_call.1} parent=1 // loop_pre_header
      _
    $region3: #{tpu_custom_call.1} parent=1 // loop_header
      %s23 = sphi 0, %s27
      %p24 = scmp.ge.s32.totalorder %s23, 5
      %s30 = sphi 0, %s42
      %s31 = sphi 0, %s38
      %s32 = sphi 0, %s30
      %s33 = sphi 0, %s31
      %s34 = sphi 0, %s32
      %s35 = sphi 0, %s33
      %s45 = sphi 0, %s47
      %s48 = sphi 0, %s45
      %s49 = sphi 0, %s48
      %s65 = sphi 0, %s49
      %s75 = sphi 0, %s77
      %s78 = sphi 0, %s75
      %s79 = sphi 0, %s78
      %s95 = sphi 0, %s79
      %s105 = sphi 0, %s107
      %s108 = sphi 0, %s105
      %s109 = sphi 0, %s108
      %s125 = sphi 0, %s109
      %s135 = sphi 0, %s137
      %s138 = sphi 0, %s135
      %s139 = sphi 0, %s138
      %s155 = sphi 0, %s139
      %s165 = sphi 0, %s167
      %s168 = sphi 0, %s165
      %s169 = sphi 0, %s168
      %s185 = sphi 0, %s169
      %s197 = sphi 0, %s199
      %s200 = sphi 0, %s197
      %s201 = sphi 0, %s200
      %s217 = sphi 0, %s201
      %s229 = sphi 0, %s231
      %s232 = sphi 0, %s229
      %s233 = sphi 0, %s232
      %s249 = sphi 0, %s233
      %s263 = sphi 0, %s265
      %s266 = sphi 0, %s263
      %s267 = sphi 0, %s266
      %s283 = sphi 0, %s267
    $region4: #{tpu_custom_call.1} parent=1 // loop_header_branch
      %26 = sbr.rel (%p24) target = $region8
    $region5: #{tpu_custom_call.1} parent=1 // loop_body
      %s28 = ssub.s32 %s23, 1
      %s29 = ssub.s32 %s23, 2
      %s36 = sadd.s32 1, %s31
      %p37 = scmp.ge.s32.totalorder %s36, 3
      %s38 = scalar_select %p37, 0, %s36
      %s39 = sadd.s32 1, %s30
      %s40 = scalar_select %p37, %s39, %s30
      %p41 = scmp.ge.s32.totalorder %s40, 1
      %s42 = scalar_select %p41, 0, %s40
      %s43 = ssub.s32 %s30, %s42
      %p44 = scmp.eq.s32.totalorder %s43, 0
      %s46 = sadd.s32 %s45, 1
      %s47 = scalar_select %p44, %s45, %s46
      %p50 = pneg %p44
      %p51 = scmp.eq.s32.totalorder %s23, 2
      %p52 = por %p50, %p51
      %p53 = scmp.ne.s32.totalorder %s45, %s48
      %p54 = scmp.eq.s32.totalorder %s23, 0
      %p55 = por %p53, %p54
      %p56 = scmp.ne.s32.totalorder %s45, %s48
      %p57 = scmp.eq.s32.totalorder %s28, 2
      %p58 = por %p56, %p57
      %p59 = scmp.ne.s32.totalorder %s48, %s49
      %p60 = scmp.eq.s32.totalorder %s28, 0
      %p61 = por %p59, %p60
      %p62 = scmp.ne.s32.totalorder %s48, %s49
      %p63 = scmp.eq.s32.totalorder %s29, 2
      %p64 = por %p62, %p63
      %p66 = scmp.ne.s32.totalorder %s49, %s65
      %p67 = scmp.eq.s32.totalorder %s29, 0
      %p68 = por %p66, %p67
      %p69 = scmp.lt.s32.totalorder %s31, 1
      %s70 = scalar_select %p69, %s31, 1
      %p71 = scmp.lt.s32.totalorder %s38, 1
      %s72 = scalar_select %p71, %s38, 1
      %s73 = ssub.s32 %s70, %s72
      %p74 = scmp.eq.s32.totalorder %s73, 0
      %s76 = sadd.s32 %s75, 1
      %s77 = scalar_select %p74, %s75, %s76
      %p80 = pneg %p74
      %p81 = scmp.eq.s32.totalorder %s23, 2
      %p82 = por %p80, %p81
      %p83 = scmp.ne.s32.totalorder %s75, %s78
      %p84 = scmp.eq.s32.totalorder %s23, 0
      %p85 = por %p83, %p84
      %p86 = scmp.ne.s32.totalorder %s75, %s78
      %p87 = scmp.eq.s32.totalorder %s28, 2
      %p88 = por %p86, %p87
      %p89 = scmp.ne.s32.totalorder %s78, %s79
      %p90 = scmp.eq.s32.totalorder %s28, 0
      %p91 = por %p89, %p90
      %p92 = scmp.ne.s32.totalorder %s78, %s79
      %p93 = scmp.eq.s32.totalorder %s29, 2
      %p94 = por %p92, %p93
      %p96 = scmp.ne.s32.totalorder %s79, %s95
      %p97 = scmp.eq.s32.totalorder %s29, 0
      %p98 = por %p96, %p97
      %p99 = scmp.lt.s32.totalorder %s31, 1
      %s100 = scalar_select %p99, %s31, 1
      %p101 = scmp.lt.s32.totalorder %s38, 1
      %s102 = scalar_select %p101, %s38, 1
      %s103 = ssub.s32 %s100, %s102
      %p104 = scmp.eq.s32.totalorder %s103, 0
      %s106 = sadd.s32 %s105, 1
      %s107 = scalar_select %p104, %s105, %s106
      %p110 = pneg %p104
      %p111 = scmp.eq.s32.totalorder %s23, 2
      %p112 = por %p110, %p111
      %p113 = scmp.ne.s32.totalorder %s105, %s108
      %p114 = scmp.eq.s32.totalorder %s23, 0
      %p115 = por %p113, %p114
      %p116 = scmp.ne.s32.totalorder %s105, %s108
      %p117 = scmp.eq.s32.totalorder %s28, 2
      %p118 = por %p116, %p117
      %p119 = scmp.ne.s32.totalorder %s108, %s109
      %p120 = scmp.eq.s32.totalorder %s28, 0
      %p121 = por %p119, %p120
      %p122 = scmp.ne.s32.totalorder %s108, %s109
      %p123 = scmp.eq.s32.totalorder %s29, 2
      %p124 = por %p122, %p123
      %p126 = scmp.ne.s32.totalorder %s109, %s125
      %p127 = scmp.eq.s32.totalorder %s29, 0
      %p128 = por %p126, %p127
      %p129 = scmp.lt.s32.totalorder %s31, 1
      %s130 = scalar_select %p129, %s31, 1
      %p131 = scmp.lt.s32.totalorder %s38, 1
      %s132 = scalar_select %p131, %s38, 1
      %s133 = ssub.s32 %s130, %s132
      %p134 = scmp.eq.s32.totalorder %s133, 0
      %s136 = sadd.s32 %s135, 1
      %s137 = scalar_select %p134, %s135, %s136
      %p140 = pneg %p134
      %p141 = scmp.eq.s32.totalorder %s23, 2
      %p142 = por %p140, %p141
      %p143 = scmp.ne.s32.totalorder %s135, %s138
      %p144 = scmp.eq.s32.totalorder %s23, 0
      %p145 = por %p143, %p144
      %p146 = scmp.ne.s32.totalorder %s135, %s138
      %p147 = scmp.eq.s32.totalorder %s28, 2
      %p148 = por %p146, %p147
      %p149 = scmp.ne.s32.totalorder %s138, %s139
      %p150 = scmp.eq.s32.totalorder %s28, 0
      %p151 = por %p149, %p150
      %p152 = scmp.ne.s32.totalorder %s138, %s139
      %p153 = scmp.eq.s32.totalorder %s29, 2
      %p154 = por %p152, %p153
      %p156 = scmp.ne.s32.totalorder %s139, %s155
      %p157 = scmp.eq.s32.totalorder %s29, 0
      %p158 = por %p156, %p157
      %p159 = scmp.lt.s32.totalorder %s31, 1
      %s160 = scalar_select %p159, %s31, 1
      %p161 = scmp.lt.s32.totalorder %s38, 1
      %s162 = scalar_select %p161, %s38, 1
      %s163 = ssub.s32 %s160, %s162
      %p164 = scmp.eq.s32.totalorder %s163, 0
      %s166 = sadd.s32 %s165, 1
      %s167 = scalar_select %p164, %s165, %s166
      %p170 = pneg %p164
      %p171 = scmp.eq.s32.totalorder %s23, 2
      %p172 = por %p170, %p171
      %p173 = scmp.ne.s32.totalorder %s165, %s168
      %p174 = scmp.eq.s32.totalorder %s23, 0
      %p175 = por %p173, %p174
      %p176 = scmp.ne.s32.totalorder %s165, %s168
      %p177 = scmp.eq.s32.totalorder %s28, 2
      %p178 = por %p176, %p177
      %p179 = scmp.ne.s32.totalorder %s168, %s169
      %p180 = scmp.eq.s32.totalorder %s28, 0
      %p181 = por %p179, %p180
      %p182 = scmp.ne.s32.totalorder %s168, %s169
      %p183 = scmp.eq.s32.totalorder %s29, 2
      %p184 = por %p182, %p183
      %p186 = scmp.ne.s32.totalorder %s169, %s185
      %p187 = scmp.eq.s32.totalorder %s29, 0
      %p188 = por %p186, %p187
      %s189 = ssub.s32 %s31, 2
      %p190 = scmp.gt.s32.totalorder %s189, 0
      %s191 = scalar_select %p190, %s189, 0
      %s192 = ssub.s32 %s38, 2
      %p193 = scmp.gt.s32.totalorder %s192, 0
      %s194 = scalar_select %p193, %s192, 0
      %s195 = ssub.s32 %s191, %s194
      %p196 = scmp.eq.s32.totalorder %s195, 0
      %s198 = sadd.s32 %s197, 1
      %s199 = scalar_select %p196, %s197, %s198
      %p202 = pneg %p196
      %p203 = scmp.eq.s32.totalorder %s23, 2
      %p204 = por %p202, %p203
      %p205 = scmp.ne.s32.totalorder %s197, %s200
      %p206 = scmp.eq.s32.totalorder %s23, 0
      %p207 = por %p205, %p206
      %p208 = scmp.ne.s32.totalorder %s197, %s200
      %p209 = scmp.eq.s32.totalorder %s28, 2
      %p210 = por %p208, %p209
      %p211 = scmp.ne.s32.totalorder %s200, %s201
      %p212 = scmp.eq.s32.totalorder %s28, 0
      %p213 = por %p211, %p212
      %p214 = scmp.ne.s32.totalorder %s200, %s201
      %p215 = scmp.eq.s32.totalorder %s29, 2
      %p216 = por %p214, %p215
      %p218 = scmp.ne.s32.totalorder %s201, %s217
      %p219 = scmp.eq.s32.totalorder %s29, 0
      %p220 = por %p218, %p219
      %s221 = ssub.s32 %s31, 2
      %p222 = scmp.gt.s32.totalorder %s221, 0
      %s223 = scalar_select %p222, %s221, 0
      %s224 = ssub.s32 %s38, 2
      %p225 = scmp.gt.s32.totalorder %s224, 0
      %s226 = scalar_select %p225, %s224, 0
      %s227 = ssub.s32 %s223, %s226
      %p228 = scmp.eq.s32.totalorder %s227, 0
      %s230 = sadd.s32 %s229, 1
      %s231 = scalar_select %p228, %s229, %s230
      %p234 = pneg %p228
      %p235 = scmp.eq.s32.totalorder %s23, 2
      %p236 = por %p234, %p235
      %p237 = scmp.ne.s32.totalorder %s229, %s232
      %p238 = scmp.eq.s32.totalorder %s23, 0
      %p239 = por %p237, %p238
      %p240 = scmp.ne.s32.totalorder %s229, %s232
      %p241 = scmp.eq.s32.totalorder %s28, 2
      %p242 = por %p240, %p241
      %p243 = scmp.ne.s32.totalorder %s232, %s233
      %p244 = scmp.eq.s32.totalorder %s28, 0
      %p245 = por %p243, %p244
      %p246 = scmp.ne.s32.totalorder %s232, %s233
      %p247 = scmp.eq.s32.totalorder %s29, 2
      %p248 = por %p246, %p247
      %p250 = scmp.ne.s32.totalorder %s233, %s249
      %p251 = scmp.eq.s32.totalorder %s29, 0
      %p252 = por %p250, %p251
      %s253 = ssub.s32 %s31, 2
      %p254 = scmp.gt.s32.totalorder %s253, 0
      %s255 = scalar_select %p254, %s253, 0
      %s256 = ssub.s32 %s38, 2
      %p257 = scmp.gt.s32.totalorder %s256, 0
      %s258 = scalar_select %p257, %s256, 0
      %s259 = ssub.s32 %s30, %s42
      %s260 = ssub.s32 %s255, %s258
      %s261 = sor.u32 %s259, %s260
      %p262 = scmp.eq.s32.totalorder %s261, 0
      %s264 = sadd.s32 %s263, 1
      %s265 = scalar_select %p262, %s263, %s264
      %p268 = pneg %p262
      %p269 = scmp.eq.s32.totalorder %s23, 2
      %p270 = por %p268, %p269
      %p271 = scmp.ne.s32.totalorder %s263, %s266
      %p272 = scmp.eq.s32.totalorder %s23, 0
      %p273 = por %p271, %p272
      %p274 = scmp.ne.s32.totalorder %s263, %s266
      %p275 = scmp.eq.s32.totalorder %s28, 2
      %p276 = por %p274, %p275
      %p277 = scmp.ne.s32.totalorder %s266, %s267
      %p278 = scmp.eq.s32.totalorder %s28, 0
      %p279 = por %p277, %p278
      %p280 = scmp.ne.s32.totalorder %s266, %s267
      %p281 = scmp.eq.s32.totalorder %s29, 2
      %p282 = por %p280, %p281
      %p284 = scmp.ne.s32.totalorder %s267, %s283
      %p285 = scmp.eq.s32.totalorder %s29, 0
      %p286 = por %p284, %p285
      %p287 = scmp.le.s32.totalorder 1, %s23
      %p288 = scmp.lt.s32.totalorder %s23, 4
      %p289 = pnand %p287, %p288
      %p290 = pneg %p289
      // Predicated region
      $region9: #{tpu_custom_call.1} parent=5 // pred_check
        _
      $region10: #{tpu_custom_call.1} parent=5 // pred_check_branch
        %292 = sbr.rel (%p289) target = $region12
      $region11: #{tpu_custom_call.1} parent=5 // pred_region
        %s293 = ssub.s32 %s23, 1
        // Predicated region
        $region13: #{tpu_custom_call.1} parent=11 // pred_check
          %p294 = pneg %p61
        $region14: #{tpu_custom_call.1} parent=11 // pred_check_branch
          %296 = sbr.rel (%p294) target = $region16
        $region15: #{tpu_custom_call.1} parent=11 // pred_region
          %s298 = ssub.s32 128, 128
          %299 = vsyncadd [#allocation4], %s298
          %s300 = smul.addr %s32, 128
          %s301 = scalar_lea.hbm %s0, %s300
          %s303 = sshll.u32 [#allocation3], 4
          %s304 = int_to_ptr.vmem [resolvable:$true] %s303
          %306 = dma.hbm_to_vmem [thread:$0]  %s301, 128, %s304, [#allocation4]
        $region16: #{tpu_custom_call.1} parent=11 // pred_fallthru
          _
      $region12: #{tpu_custom_call.1} parent=5 // pred_fallthru
        _
      %p307 = scmp.lt.s32.totalorder %s23, 3
      // Predicated region
      $region17: #{tpu_custom_call.1} parent=5 // pred_check
        %p308 = pneg %p307
      $region18: #{tpu_custom_call.1} parent=5 // pred_check_branch
        %310 = sbr.rel (%p308) target = $region20
      $region19: #{tpu_custom_call.1} parent=5 // pred_region
        // Predicated region
        $region21: #{tpu_custom_call.1} parent=19 // pred_check
          %p311 = pneg %p85
        $region22: #{tpu_custom_call.1} parent=19 // pred_check_branch
          %313 = sbr.rel (%p311) target = $region24
        $region23: #{tpu_custom_call.1} parent=19 // pred_region
          %s314 = sand.u32 %s23, 1
          %s315 = scalar_lea.sflag [#allocation7], %s314
          %s316 = sand.u32 %s75, 1
          %s317 = smul.addr %s316, 192
          %s318 = scalar_lea.vmem [#allocation6], %s317
          %p319 = scmp.lt.s32.totalorder %s31, 1
          %s320 = scalar_select %p319, %s31, 1
          %s322 = ssub.s32 3072, 3072
          %323 = vsyncadd %s315, %s322
          %s324 = smul.addr %s320, 48
          %s325 = smul.addr %s324, 64
          %s326 = scalar_lea.hbm %s1, %s325
          %s327 = sshll.u32 %s318, 4
          %s328 = int_to_ptr.vmem [resolvable:$true] %s327
          %333 = dma.hbm_to_vmem [thread:$0]  %s326, 3072, %s328, %s315, 192, 192, 12
        $region24: #{tpu_custom_call.1} parent=19 // pred_fallthru
          _
        // Predicated region
        $region25: #{tpu_custom_call.1} parent=19 // pred_check
          %p334 = pneg %p115
        $region26: #{tpu_custom_call.1} parent=19 // pred_check_branch
          %336 = sbr.rel (%p334) target = $region28
        $region27: #{tpu_custom_call.1} parent=19 // pred_region
          %p337 = scmp.lt.s32.totalorder %s31, 1
          %s338 = scalar_select %p337, %s31, 1
          %p339 = scmp.lt.s32.totalorder %s338, 1
          %s340 = scalar_select %p339, %s338, 1
          %s341 = smul.addr %s340, 3
          %s342 = scalar_lea.vmem %s2, %s341
          %p343 = scmp.lt.s32.totalorder %s31, 1
          %s344 = scalar_select %p343, %s31, 1
        $region28: #{tpu_custom_call.1} parent=19 // pred_fallthru
          _
        // Predicated region
        $region29: #{tpu_custom_call.1} parent=19 // pred_check
          %p345 = pneg %p145
        $region30: #{tpu_custom_call.1} parent=19 // pred_check_branch
          %347 = sbr.rel (%p345) target = $region32
        $region31: #{tpu_custom_call.1} parent=19 // pred_region
          %s348 = sand.u32 %s23, 1
          %s349 = scalar_lea.sflag [#allocation7], %s348
          %s350 = sand.u32 %s135, 1
          %s351 = smul.addr %s350, 64
          %s352 = scalar_lea.vmem [#allocation8], %s351
          %p353 = scmp.lt.s32.totalorder %s31, 1
          %s354 = scalar_select %p353, %s31, 1
          %s356 = ssub.s32 1024, 1024
          %357 = vsyncadd %s349, %s356
          %s358 = smul.addr %s354, 16
          %s359 = smul.addr %s358, 64
          %s360 = scalar_lea.hbm %s3, %s359
          %s361 = sshll.u32 %s352, 4
          %s362 = int_to_ptr.vmem [resolvable:$true] %s361
          %367 = dma.hbm_to_vmem [thread:$0]  %s360, 1024, %s362, %s349, 64, 64, 4
        $region32: #{tpu_custom_call.1} parent=19 // pred_fallthru
          _
        // Predicated region
        $region33: #{tpu_custom_call.1} parent=19 // pred_check
          %p368 = pneg %p175
        $region34: #{tpu_custom_call.1} parent=19 // pred_check_branch
          %370 = sbr.rel (%p368) target = $region36
        $region35: #{tpu_custom_call.1} parent=19 // pred_region
          %p371 = scmp.lt.s32.totalorder %s31, 1
          %s372 = scalar_select %p371, %s31, 1
          %p373 = scmp.lt.s32.totalorder %s372, 1
          %s374 = scalar_select %p373, %s372, 1
          %s375 = scalar_lea.vmem %s4, %s374
          %p376 = scmp.lt.s32.totalorder %s31, 1
          %s377 = scalar_select %p376, %s31, 1
        $region36: #{tpu_custom_call.1} parent=19 // pred_fallthru
          _
        // Predicated region
        $region37: #{tpu_custom_call.1} parent=19 // pred_check
          %p378 = pneg %p207
        $region38: #{tpu_custom_call.1} parent=19 // pred_check_branch
          %380 = sbr.rel (%p378) target = $region40
        $region39: #{tpu_custom_call.1} parent=19 // pred_region
          %s381 = sand.u32 %s197, 1
          %s382 = scalar_lea.sflag [#allocation10], %s381
          %s383 = sand.u32 %s197, 1
          %s384 = smul.addr %s383, 64
          %s385 = scalar_lea.vmem [#allocation9], %s384
          %s386 = ssub.s32 %s31, 2
          %p387 = scmp.gt.s32.totalorder %s386, 0
          %s388 = scalar_select %p387, %s386, 0
          %s390 = ssub.s32 1024, 1024
          %391 = vsyncadd %s382, %s390
          %s392 = smul.addr %s388, 64
          %s393 = scalar_lea.hbm %s5, %s392
          %s394 = sshll.u32 %s385, 4
          %s395 = int_to_ptr.vmem [resolvable:$true] %s394
          %400 = dma.hbm_to_vmem [thread:$0]  %s393, 1024, %s395, %s382, 64, 64, 4
        $region40: #{tpu_custom_call.1} parent=19 // pred_fallthru
          _
        // Predicated region
        $region41: #{tpu_custom_call.1} parent=19 // pred_check
          %p401 = pneg %p239
        $region42: #{tpu_custom_call.1} parent=19 // pred_check_branch
          %403 = sbr.rel (%p401) target = $region44
        $region43: #{tpu_custom_call.1} parent=19 // pred_region
          %s404 = ssub.s32 %s31, 2
          %p405 = scmp.gt.s32.totalorder %s404, 0
          %s406 = scalar_select %p405, %s404, 0
          %p407 = scmp.lt.s32.totalorder %s406, 0
          %s408 = scalar_select %p407, %s406, 0
          %s409 = scalar_lea.vmem %s6, %s408
          %s410 = ssub.s32 %s31, 2
          %p411 = scmp.gt.s32.totalorder %s410, 0
          %s412 = scalar_select %p411, %s410, 0
        $region44: #{tpu_custom_call.1} parent=19 // pred_fallthru
          _
      $region20: #{tpu_custom_call.1} parent=5 // pred_fallthru
        _
      %p413 = scmp.le.s32.totalorder 1, %s23
      %p414 = scmp.lt.s32.totalorder %s23, 4
      %p415 = pnand %p413, %p414
      %p416 = pneg %p415
      // Predicated region
      $region45: #{tpu_custom_call.1} parent=5 // pred_check
        _
      $region46: #{tpu_custom_call.1} parent=5 // pred_check_branch
        %418 = sbr.rel (%p415) target = $region48
      $region47: #{tpu_custom_call.1} parent=5 // pred_region
        %s419 = ssub.s32 %s23, 1
        // Predicated region
        $region49: #{tpu_custom_call.1} parent=47 // pred_check
          %p420 = pneg %p61
        $region50: #{tpu_custom_call.1} parent=47 // pred_check_branch
          %422 = sbr.rel (%p420) target = $region52
        $region51: #{tpu_custom_call.1} parent=47 // pred_region
          %423 = dma.done [#allocation4], 128
        $region52: #{tpu_custom_call.1} parent=47 // pred_fallthru
          _
        %s424 = sand.u32 %s28, 1
        %s425 = scalar_lea.sflag [#allocation7], %s424
        %s426 = sand.u32 %s78, 1
        %s427 = smul.addr %s426, 192
        %s428 = scalar_lea.vmem [#allocation6], %s427
        // Predicated region
        $region53: #{tpu_custom_call.1} parent=47 // pred_check
          %p429 = pneg %p91
        $region54: #{tpu_custom_call.1} parent=47 // pred_check_branch
          %431 = sbr.rel (%p429) target = $region56
        $region55: #{tpu_custom_call.1} parent=47 // pred_region
          %432 = dma.done %s425, 3072
        $region56: #{tpu_custom_call.1} parent=47 // pred_fallthru
          _
        %s433 = sand.u32 %s28, 1
        %s434 = scalar_lea.sflag [#allocation7], %s433
        %s435 = sand.u32 %s138, 1
        %s436 = smul.addr %s435, 64
        %s437 = scalar_lea.vmem [#allocation8], %s436
        // Predicated region
        $region57: #{tpu_custom_call.1} parent=47 // pred_check
          %p438 = pneg %p151
        $region58: #{tpu_custom_call.1} parent=47 // pred_check_branch
          %440 = sbr.rel (%p438) target = $region60
        $region59: #{tpu_custom_call.1} parent=47 // pred_region
          %441 = dma.done %s434, 1024
        $region60: #{tpu_custom_call.1} parent=47 // pred_fallthru
          _
        %s442 = sand.u32 %s200, 1
        %s443 = scalar_lea.sflag [#allocation10], %s442
        %s444 = sand.u32 %s200, 1
        %s445 = smul.addr %s444, 64
        %s446 = scalar_lea.vmem [#allocation9], %s445
        // Predicated region
        $region61: #{tpu_custom_call.1} parent=47 // pred_check
          %p447 = pneg %p213
        $region62: #{tpu_custom_call.1} parent=47 // pred_check_branch
          %449 = sbr.rel (%p447) target = $region64
        $region63: #{tpu_custom_call.1} parent=47 // pred_region
          %450 = dma.done %s443, 1024
        $region64: #{tpu_custom_call.1} parent=47 // pred_fallthru
          _
        %p451 = pneg %p61
        %p452 = pneg %p58
        %s453 = sand.u32 %s28, 1
        %s454 = scalar_lea.sflag [#allocation7], %s453
        %s455 = sand.u32 %s78, 1
        %s456 = smul.addr %s455, 192
        %s457 = scalar_lea.vmem [#allocation6], %s456
        %p458 = pneg %p91
        %p459 = pneg %p88
        %p460 = scmp.lt.s32.totalorder %s33, 1
        %s461 = scalar_select %p460, %s33, 1
        %p462 = scmp.lt.s32.totalorder %s461, 1
        %s463 = scalar_select %p462, %s461, 1
        %s464 = smul.addr %s463, 3
        %s465 = scalar_lea.vmem %s2, %s464
        %p466 = pneg %p121
        %p467 = pneg %p118
        %s468 = sand.u32 %s28, 1
        %s469 = scalar_lea.sflag [#allocation7], %s468
        %s470 = sand.u32 %s138, 1
        %s471 = smul.addr %s470, 64
        %s472 = scalar_lea.vmem [#allocation8], %s471
        %p473 = pneg %p151
        %p474 = pneg %p148
        %p475 = scmp.lt.s32.totalorder %s33, 1
        %s476 = scalar_select %p475, %s33, 1
        %p477 = scmp.lt.s32.totalorder %s476, 1
        %s478 = scalar_select %p477, %s476, 1
        %s479 = scalar_lea.vmem %s4, %s478
        %p480 = pneg %p181
        %p481 = pneg %p178
        %s482 = sand.u32 %s200, 1
        %s483 = scalar_lea.sflag [#allocation10], %s482
        %s484 = sand.u32 %s200, 1
        %s485 = smul.addr %s484, 64
        %s486 = scalar_lea.vmem [#allocation9], %s485
        %p487 = pneg %p213
        %p488 = pneg %p210
        %s489 = ssub.s32 %s33, 2
        %p490 = scmp.gt.s32.totalorder %s489, 0
        %s491 = scalar_select %p490, %s489, 0
        %p492 = scmp.lt.s32.totalorder %s491, 0
        %s493 = scalar_select %p492, %s491, 0
        %s494 = scalar_lea.vmem %s6, %s493
        %p495 = pneg %p245
        %p496 = pneg %p242
        %p497 = pneg %p279
        %p498 = pneg %p276
        %s499 = sand.u32 %s266, 1
        %s500 = scalar_lea.sflag [#allocation5], %s499
        %s501 = sand.u32 %s266, 1
        %s502 = smul.addr %s501, 8
        %s503 = scalar_lea.vmem [#allocation11], %s502
        %p504 = scmp.lt.s32.totalorder %s33, 1
        %s505 = scalar_select %p504, %s33, 1
        %p506 = scmp.lt.s32.totalorder %s33, 1
        %s507 = scalar_select %p506, %s33, 1
        %p508 = scmp.lt.s32.totalorder %s507, 1
        %s509 = scalar_select %p508, %s507, 1
        %s510 = smul.addr %s509, 3
        %s511 = scalar_lea.vmem %s2, %s510
        %p512 = scmp.lt.s32.totalorder %s33, 1
        %s513 = scalar_select %p512, %s33, 1
        %p514 = scmp.lt.s32.totalorder %s33, 1
        %s515 = scalar_select %p514, %s33, 1
        %p516 = scmp.lt.s32.totalorder %s33, 1
        %s517 = scalar_select %p516, %s33, 1
        %p518 = scmp.lt.s32.totalorder %s517, 1
        %s519 = scalar_select %p518, %s517, 1
        %s520 = scalar_lea.vmem %s4, %s519
        %p521 = scmp.lt.s32.totalorder %s33, 1
        %s522 = scalar_select %p521, %s33, 1
        %s523 = ssub.s32 %s33, 2
        %p524 = scmp.gt.s32.totalorder %s523, 0
        %s525 = scalar_select %p524, %s523, 0
        %s526 = ssub.s32 %s33, 2
        %p527 = scmp.gt.s32.totalorder %s526, 0
        %s528 = scalar_select %p527, %s526, 0
        %p529 = scmp.lt.s32.totalorder %s528, 0
        %s530 = scalar_select %p529, %s528, 0
        %s531 = scalar_lea.vmem %s6, %s530
        %s532 = ssub.s32 %s33, 2
        %p533 = scmp.gt.s32.totalorder %s532, 0
        %s534 = scalar_select %p533, %s532, 0
        %s535 = ssub.s32 %s33, 2
        %p536 = scmp.gt.s32.totalorder %s535, 0
        %s537 = scalar_select %p536, %s535, 0
        %p539 = scmp.eq.s32.totalorder %s33, 0
        // Predicated region
        $region65: #{tpu_custom_call.1} parent=47 // pred_check
          %p540 = pneg %p539
        $region66: #{tpu_custom_call.1} parent=47 // pred_check_branch
          %542 = sbr.rel (%p540) target = $region68
        $region67: #{tpu_custom_call.1} parent=47 // pred_region
          %v543 = vld [vmem:[#allocation3] sm:$0xff]
          %544 = vst [vmem:[#allocation2] sm:$0xff] %v543
        $region68: #{tpu_custom_call.1} parent=47 // pred_fallthru
          _
        %p545 = scmp.lt.s32.totalorder %s33, 2
        // Predicated region
        $region69: #{tpu_custom_call.1} parent=47 // pred_check
          %p546 = pneg %p545
        $region70: #{tpu_custom_call.1} parent=47 // pred_check_branch
          %548 = sbr.rel (%p546) target = $region72
        $region71: #{tpu_custom_call.1} parent=47 // pred_region
          %v549 = vld [vmem:[#allocation2] sm:$0xff]
          %v550 = vpack.c.bf16 %v549, %v549
          %v551 = vld [vmem:[%s428] sm:$0xff]
          %v552 = vld [vmem:[%s428 + $0x8] sm:$0xf]
          %v553 = vld [vmem:[%s428 + $0xc] sm:$0xff]
          %v554 = vld [vmem:[%s428 + $0x14] sm:$0xf]
          %v555 = vld [vmem:[%s428 + $0x18] sm:$0xff]
          %v556 = vld [vmem:[%s428 + $0x20] sm:$0xf]
          %v557 = vld [vmem:[%s428 + $0x24] sm:$0xff]
          %v558 = vld [vmem:[%s428 + $0x2c] sm:$0xf]
          %v559 = vld [vmem:[%s428 + $0x30] sm:$0xff]
          %v560 = vld [vmem:[%s428 + $0x38] sm:$0xf]
          %v561 = vld [vmem:[%s428 + $0x3c] sm:$0xff]
          %v562 = vld [vmem:[%s428 + $0x44] sm:$0xf]
          %v563 = vld [vmem:[%s428 + $0x48] sm:$0xff]
          %v564 = vld [vmem:[%s428 + $0x50] sm:$0xf]
          %v565 = vld [vmem:[%s428 + $0x54] sm:$0xff]
          %v566 = vld [vmem:[%s428 + $0x5c] sm:$0xf]
          %v567 = vld [vmem:[%s428 + $0x60] sm:$0xff]
          %v568 = vld [vmem:[%s428 + $0x68] sm:$0xf]
          %v569 = vld [vmem:[%s428 + $0x6c] sm:$0xff]
          %v570 = vld [vmem:[%s428 + $0x74] sm:$0xf]
          %v571 = vld [vmem:[%s428 + $0x78] sm:$0xff]
          %v572 = vld [vmem:[%s428 + $0x80] sm:$0xf]
          %v573 = vld [vmem:[%s428 + $0x84] sm:$0xff]
          %v574 = vld [vmem:[%s428 + $0x8c] sm:$0xf]
          %v575 = vld [vmem:[%s428 + $0x90] sm:$0xff]
          %v576 = vld [vmem:[%s428 + $0x98] sm:$0xf]
          %v577 = vld [vmem:[%s428 + $0x9c] sm:$0xff]
          %v578 = vld [vmem:[%s428 + $0xa4] sm:$0xf]
          %v579 = vld [vmem:[%s428 + $0xa8] sm:$0xff]
          %v580 = vld [vmem:[%s428 + $0xb0] sm:$0xf]
          %v581 = vld [vmem:[%s428 + $0xb4] sm:$0xff]
          %v582 = vld [vmem:[%s428 + $0xbc] sm:$0xf]
          %v583 = vld [vmem:[%s511] sm:$0x7]
          %v585 = vlaneseq
          %v586 = vshrl.u32 %v585, 7
          %v587 = vsub.s32 0, %v586
          %v588 = vrot.slane %v583, %v587
          %v589 = vlaneseq
          %v590 = vshrl.u32 %v589, 7
          %v591 = vsub.s32 1, %v590
          %v592 = vrot.slane %v583, %v591
          %v593 = vlaneseq
          %v594 = vshrl.u32 %v593, 7
          %v595 = vsub.s32 2, %v594
          %v596 = vrot.slane %v583, %v595
          %v632 = vunpack.c.l.b16 %v551
          %v633 = vunpack.c.h.b16 %v551
          %v634 = vunpack.c.l.b16 %v552
          %v635 = vunpack.c.l.b16 %v553
          %v636 = vunpack.c.h.b16 %v553
          %v637 = vunpack.c.l.b16 %v554
          %v638 = vunpack.c.l.b16 %v555
          %v639 = vunpack.c.h.b16 %v555
          %v640 = vunpack.c.l.b16 %v556
          %v641 = vunpack.c.l.b16 %v557
          %v642 = vunpack.c.h.b16 %v557
          %v643 = vunpack.c.l.b16 %v558
          %v644 = vunpack.c.l.b16 %v559
          %v645 = vunpack.c.h.b16 %v559
          %v646 = vunpack.c.l.b16 %v560
          %v647 = vunpack.c.l.b16 %v561
          %v648 = vunpack.c.h.b16 %v561
          %v649 = vunpack.c.l.b16 %v562
          %v650 = vunpack.c.l.b16 %v563
          %v651 = vunpack.c.h.b16 %v563
          %v652 = vunpack.c.l.b16 %v564
          %v653 = vunpack.c.l.b16 %v565
          %v654 = vunpack.c.h.b16 %v565
          %v655 = vunpack.c.l.b16 %v566
          %v656 = vunpack.c.l.b16 %v567
          %v657 = vunpack.c.h.b16 %v567
          %v658 = vunpack.c.l.b16 %v568
          %v659 = vunpack.c.l.b16 %v569
          %v660 = vunpack.c.h.b16 %v569
          %v661 = vunpack.c.l.b16 %v570
          %v662 = vunpack.c.l.b16 %v571
          %v663 = vunpack.c.h.b16 %v571
          %v664 = vunpack.c.l.b16 %v572
          %v665 = vunpack.c.l.b16 %v573
          %v666 = vunpack.c.h.b16 %v573
          %v667 = vunpack.c.l.b16 %v574
          %v668 = vunpack.c.l.b16 %v575
          %v669 = vunpack.c.h.b16 %v575
          %v670 = vunpack.c.l.b16 %v576
          %v671 = vunpack.c.l.b16 %v577
          %v672 = vunpack.c.h.b16 %v577
          %v673 = vunpack.c.l.b16 %v578
          %v674 = vunpack.c.l.b16 %v579
          %v675 = vunpack.c.h.b16 %v579
          %v676 = vunpack.c.l.b16 %v580
          %v677 = vunpack.c.l.b16 %v581
          %v678 = vunpack.c.h.b16 %v581
          %v679 = vunpack.c.l.b16 %v582
          %v680 = vpack.c.b16 %v635, %v632
          %v681 = vpack.c.b16 %v636, %v633
          %v682 = vpack.c.b16 %v637, %v634
          %v683 = vpack.c.b16 %v641, %v638
          %v684 = vpack.c.b16 %v642, %v639
          %v685 = vpack.c.b16 %v643, %v640
          %v686 = vpack.c.b16 %v647, %v644
          %v687 = vpack.c.b16 %v648, %v645
          %v688 = vpack.c.b16 %v649, %v646
          %v689 = vpack.c.b16 %v653, %v650
          %v690 = vpack.c.b16 %v654, %v651
          %v691 = vpack.c.b16 %v655, %v652
          %v692 = vpack.c.b16 %v659, %v656
          %v693 = vpack.c.b16 %v660, %v657
          %v694 = vpack.c.b16 %v661, %v658
          %v695 = vpack.c.b16 %v665, %v662
          %v696 = vpack.c.b16 %v666, %v663
          %v697 = vpack.c.b16 %v667, %v664
          %v698 = vpack.c.b16 %v671, %v668
          %v699 = vpack.c.b16 %v672, %v669
          %v700 = vpack.c.b16 %v673, %v670
          %v701 = vpack.c.b16 %v677, %v674
          %v702 = vpack.c.b16 %v678, %v675
          %v703 = vpack.c.b16 %v679, %v676
          %728 = vmatprep.subr.bf16.mxu0 %v681
          %729 = vmatpush1.bf16.msra.mxu0 %v680
          %730 = vmatprep.subr.bf16.mxu0 %v684
          %731 = vmatpush1.bf16.msra.mxu0 %v683
          %732 = vmatprep.subr.bf16.mxu0 %v687
          %733 = vmatpush1.bf16.msra.mxu0 %v686
          %734 = vmatprep.subr.bf16.mxu0 %v690
          %735 = vmatpush1.bf16.msra.mxu0 %v689
          %736 = vmatprep.subr.bf16.mxu0 %v693
          %737 = vmatpush1.bf16.msra.mxu0 %v692
          %738 = vmatprep.subr.bf16.mxu0 %v696
          %739 = vmatpush1.bf16.msra.mxu0 %v695
          %740 = vmatprep.subr.bf16.mxu0 %v699
          %741 = vmatpush1.bf16.msra.mxu0 %v698
          %742 = vmatprep.subr.bf16.mxu0 %v702
          %743 = vmatpush1.bf16.msra.mxu0 %v701
          %744 = vmatprep.subr.bf16.mxu0 0
          %745 = vmatpush1.bf16.msra.mxu0 0
          %746 = vmatprep.subr.bf16.mxu0 0
          %747 = vmatpush1.bf16.msra.mxu0 0
          %748 = vmatprep.subr.bf16.mxu0 0
          %749 = vmatpush1.bf16.msra.mxu0 0
          %750 = vmatprep.subr.bf16.mxu0 0
          %751 = vmatpush1.bf16.msra.mxu0 0
          %752 = vmatprep.subr.bf16.mxu0 0
          %753 = vmatpush1.bf16.msra.mxu0 0
          %754 = vmatprep.subr.bf16.mxu0 0
          %755 = vmatpush1.bf16.msra.mxu0 0
          %756 = vmatprep.subr.bf16.mxu0 0
          %757 = vmatpush1.bf16.msra.mxu0 0
          %758 = vmatprep.subr.bf16.mxu0 0
          %759 = vmatpush1.bf16.msra.mxu0 0
          %760 = vmatprep.mubr.bf16.mxu0 0
          %761 = vmatmul.mubr.bf16.gmra.mrb[0].mxu0 %v550
          %v762 = vpop.f32.mrb[0].mxu0
          %v763 = vadd.f32 %v588, %v762
          %v764 = vpop.f32.mrb[0].mxu0
          %v765 = vadd.f32 %v592, %v764
          %v766 = vpop.f32.mrb[0].mxu0
          %v767 = vpop.f32.mrb[0].mxu0
          %768 = vdwg.mxu0
          %769 = vmatprep.subr.bf16.mxu0 0
          %770 = vmatpush1.bf16.msra.mxu0 %v682
          %771 = vmatprep.subr.bf16.mxu0 0
          %772 = vmatpush1.bf16.msra.mxu0 %v685
          %773 = vmatprep.subr.bf16.mxu0 0
          %774 = vmatpush1.bf16.msra.mxu0 %v688
          %775 = vmatprep.subr.bf16.mxu0 0
          %776 = vmatpush1.bf16.msra.mxu0 %v691
          %777 = vmatprep.subr.bf16.mxu0 0
          %778 = vmatpush1.bf16.msra.mxu0 %v694
          %779 = vmatprep.subr.bf16.mxu0 0
          %780 = vmatpush1.bf16.msra.mxu0 %v697
          %781 = vmatprep.subr.bf16.mxu0 0
          %782 = vmatpush1.bf16.msra.mxu0 %v700
          %783 = vmatprep.subr.bf16.mxu0 0
          %784 = vmatpush1.bf16.msra.mxu0 %v703
          %785 = vmatprep.subr.bf16.mxu0 0
          %786 = vmatpush1.bf16.msra.mxu0 0
          %787 = vmatprep.subr.bf16.mxu0 0
          %788 = vmatpush1.bf16.msra.mxu0 0
          %789 = vmatprep.subr.bf16.mxu0 0
          %790 = vmatpush1.bf16.msra.mxu0 0
          %791 = vmatprep.subr.bf16.mxu0 0
          %792 = vmatpush1.bf16.msra.mxu0 0
          %793 = vmatprep.subr.bf16.mxu0 0
          %794 = vmatpush1.bf16.msra.mxu0 0
          %795 = vmatprep.subr.bf16.mxu0 0
          %796 = vmatpush1.bf16.msra.mxu0 0
          %797 = vmatprep.subr.bf16.mxu0 0
          %798 = vmatpush1.bf16.msra.mxu0 0
          %799 = vmatprep.subr.bf16.mxu0 0
          %800 = vmatpush1.bf16.msra.mxu0 0
          %801 = vmatprep.mubr.bf16.mxu0 0
          %802 = vmatmul.mubr.bf16.gmra.mrb[0].mxu0 %v550
          %v803 = vpop.f32.mrb[0].mxu0
          %v804 = vadd.f32 %v596, %v803
          %v805 = vpop.f32.mrb[0].mxu0
          %v806 = vpop.f32.mrb[0].mxu0
          %v807 = vpop.f32.mrb[0].mxu0
          %808 = vdwg.mxu0
          %810 = vrot.lane.b32.xlu0 %v763, 96
          %v811 = vpop.permute.xlu0 %810
          %813 = vrot.lane.b32.xlu0 %v763, 64
          %v814 = vpop.permute.xlu0 %813
          %816 = vrot.lane.b32.xlu0 %v763, 32
          %v817 = vpop.permute.xlu0 %816
          %v819 = vcombine.low %v763, %v814
          %v820 = vcombine.high %v763, %v814
          %v822 = vunpack.c.l.s4 1983009808
          %v823 = vunpack.c.0.s8 %v822
          %v824 = vlaneseq
          %v825 = vshrl.u32 %v824, 7
          %v826 = vsub.s32 %v823, %v825
          %v827 = vrot.slane %v819, %v826
          %v829 = vunpack.c.l.s4 1983009808
          %v830 = vunpack.c.0.s8 %v829
          %v831 = vlaneseq
          %v832 = vshrl.u32 %v831, 7
          %v833 = vsub.s32 %v830, %v832
          %v834 = vrot.slane %v820, %v833
          %v835 = vcombine.low %v811, %v817
          %v836 = vcombine.high %v811, %v817
          %v838 = vunpack.c.l.s4 1983009808
          %v839 = vunpack.c.0.s8 %v838
          %v840 = vlaneseq
          %v841 = vshrl.u32 %v840, 7
          %v842 = vsub.s32 %v839, %v841
          %v843 = vrot.slane %v835, %v842
          %v845 = vunpack.c.l.s4 1983009808
          %v846 = vunpack.c.0.s8 %v845
          %v847 = vlaneseq
          %v848 = vshrl.u32 %v847, 7
          %v849 = vsub.s32 %v846, %v848
          %v850 = vrot.slane %v836, %v849
          %v851 = vcombine.low %v827, %v843
          %v852 = vcombine.high %v827, %v843
          %v854 = vunpack.c.l.s4 1934713408
          %v855 = vunpack.c.0.s8 %v854
          %v856 = vlaneseq
          %v857 = vshrl.u32 %v856, 7
          %v858 = vsub.s32 %v855, %v857
          %v859 = vrot.slane %v851, %v858
          %v861 = vunpack.c.l.s4 1934713408
          %v862 = vunpack.c.0.s8 %v861
          %v863 = vlaneseq
          %v864 = vshrl.u32 %v863, 7
          %v865 = vsub.s32 %v862, %v864
          %v866 = vrot.slane %v852, %v865
          %v867 = vcombine.low %v834, %v850
          %v868 = vcombine.high %v834, %v850
          %v870 = vunpack.c.l.s4 1934713408
          %v871 = vunpack.c.0.s8 %v870
          %v872 = vlaneseq
          %v873 = vshrl.u32 %v872, 7
          %v874 = vsub.s32 %v871, %v873
          %v875 = vrot.slane %v867, %v874
          %v877 = vunpack.c.l.s4 1934713408
          %v878 = vunpack.c.0.s8 %v877
          %v879 = vlaneseq
          %v880 = vshrl.u32 %v879, 7
          %v881 = vsub.s32 %v878, %v880
          %v882 = vrot.slane %v868, %v881
          %v883 = vcombine.high %v859, 0.0
          %v884 = vcombine.high %v866, 0.0
          %v885 = vcombine.high %v875, 0.0
          %v886 = vcombine.high %v882, 0.0
          %888 = vrot.lane.b32.xlu0 %v765, 96
          %v889 = vpop.permute.xlu0 %888
          %891 = vrot.lane.b32.xlu0 %v765, 64
          %v892 = vpop.permute.xlu0 %891
          %894 = vrot.lane.b32.xlu0 %v765, 32
          %v895 = vpop.permute.xlu0 %894
          %v897 = vcombine.low %v765, %v892
          %v898 = vcombine.high %v765, %v892
          %v900 = vunpack.c.l.s4 1983009808
          %v901 = vunpack.c.0.s8 %v900
          %v902 = vlaneseq
          %v903 = vshrl.u32 %v902, 7
          %v904 = vsub.s32 %v901, %v903
          %v905 = vrot.slane %v897, %v904
          %v907 = vunpack.c.l.s4 1983009808
          %v908 = vunpack.c.0.s8 %v907
          %v909 = vlaneseq
          %v910 = vshrl.u32 %v909, 7
          %v911 = vsub.s32 %v908, %v910
          %v912 = vrot.slane %v898, %v911
          %v913 = vcombine.low %v889, %v895
          %v914 = vcombine.high %v889, %v895
          %v916 = vunpack.c.l.s4 1983009808
          %v917 = vunpack.c.0.s8 %v916
          %v918 = vlaneseq
          %v919 = vshrl.u32 %v918, 7
          %v920 = vsub.s32 %v917, %v919
          %v921 = vrot.slane %v913, %v920
          %v923 = vunpack.c.l.s4 1983009808
          %v924 = vunpack.c.0.s8 %v923
          %v925 = vlaneseq
          %v926 = vshrl.u32 %v925, 7
          %v927 = vsub.s32 %v924, %v926
          %v928 = vrot.slane %v914, %v927
          %v929 = vcombine.low %v905, %v921
          %v930 = vcombine.high %v905, %v921
          %v932 = vunpack.c.l.s4 1934713408
          %v933 = vunpack.c.0.s8 %v932
          %v934 = vlaneseq
          %v935 = vshrl.u32 %v934, 7
          %v936 = vsub.s32 %v933, %v935
          %v937 = vrot.slane %v929, %v936
          %v939 = vunpack.c.l.s4 1934713408
          %v940 = vunpack.c.0.s8 %v939
          %v941 = vlaneseq
          %v942 = vshrl.u32 %v941, 7
          %v943 = vsub.s32 %v940, %v942
          %v944 = vrot.slane %v930, %v943
          %v945 = vcombine.low %v912, %v928
          %v946 = vcombine.high %v912, %v928
          %v948 = vunpack.c.l.s4 1934713408
          %v949 = vunpack.c.0.s8 %v948
          %v950 = vlaneseq
          %v951 = vshrl.u32 %v950, 7
          %v952 = vsub.s32 %v949, %v951
          %v953 = vrot.slane %v945, %v952
          %v955 = vunpack.c.l.s4 1934713408
          %v956 = vunpack.c.0.s8 %v955
          %v957 = vlaneseq
          %v958 = vshrl.u32 %v957, 7
          %v959 = vsub.s32 %v956, %v958
          %v960 = vrot.slane %v946, %v959
          %v961 = vcombine.high %v937, 0.0
          %v962 = vcombine.high %v944, 0.0
          %v963 = vcombine.high %v953, 0.0
          %v964 = vcombine.high %v960, 0.0
          %966 = vrot.lane.b32.xlu0 %v804, 96
          %v967 = vpop.permute.xlu0 %966
          %969 = vrot.lane.b32.xlu0 %v804, 64
          %v970 = vpop.permute.xlu0 %969
          %972 = vrot.lane.b32.xlu0 %v804, 32
          %v973 = vpop.permute.xlu0 %972
          %v975 = vcombine.low %v804, %v970
          %v976 = vcombine.high %v804, %v970
          %v978 = vunpack.c.l.s4 1983009808
          %v979 = vunpack.c.0.s8 %v978
          %v980 = vlaneseq
          %v981 = vshrl.u32 %v980, 7
          %v982 = vsub.s32 %v979, %v981
          %v983 = vrot.slane %v975, %v982
          %v985 = vunpack.c.l.s4 1983009808
          %v986 = vunpack.c.0.s8 %v985
          %v987 = vlaneseq
          %v988 = vshrl.u32 %v987, 7
          %v989 = vsub.s32 %v986, %v988
          %v990 = vrot.slane %v976, %v989
          %v991 = vcombine.low %v967, %v973
          %v992 = vcombine.high %v967, %v973
          %v994 = vunpack.c.l.s4 1983009808
          %v995 = vunpack.c.0.s8 %v994
          %v996 = vlaneseq
          %v997 = vshrl.u32 %v996, 7
          %v998 = vsub.s32 %v995, %v997
          %v999 = vrot.slane %v991, %v998
          %v1001 = vunpack.c.l.s4 1983009808
          %v1002 = vunpack.c.0.s8 %v1001
          %v1003 = vlaneseq
          %v1004 = vshrl.u32 %v1003, 7
          %v1005 = vsub.s32 %v1002, %v1004
          %v1006 = vrot.slane %v992, %v1005
          %v1007 = vcombine.low %v983, %v999
          %v1008 = vcombine.high %v983, %v999
          %v1010 = vunpack.c.l.s4 1934713408
          %v1011 = vunpack.c.0.s8 %v1010
          %v1012 = vlaneseq
          %v1013 = vshrl.u32 %v1012, 7
          %v1014 = vsub.s32 %v1011, %v1013
          %v1015 = vrot.slane %v1007, %v1014
          %v1017 = vunpack.c.l.s4 1934713408
          %v1018 = vunpack.c.0.s8 %v1017
          %v1019 = vlaneseq
          %v1020 = vshrl.u32 %v1019, 7
          %v1021 = vsub.s32 %v1018, %v1020
          %v1022 = vrot.slane %v1008, %v1021
          %v1023 = vcombine.low %v990, %v1006
          %v1024 = vcombine.high %v990, %v1006
          %v1026 = vunpack.c.l.s4 1934713408
          %v1027 = vunpack.c.0.s8 %v1026
          %v1028 = vlaneseq
          %v1029 = vshrl.u32 %v1028, 7
          %v1030 = vsub.s32 %v1027, %v1029
          %v1031 = vrot.slane %v1023, %v1030
          %v1033 = vunpack.c.l.s4 1934713408
          %v1034 = vunpack.c.0.s8 %v1033
          %v1035 = vlaneseq
          %v1036 = vshrl.u32 %v1035, 7
          %v1037 = vsub.s32 %v1034, %v1036
          %v1038 = vrot.slane %v1024, %v1037
          %v1039 = vcombine.high %v1015, 0.0
          %v1040 = vcombine.high %v1022, 0.0
          %v1041 = vcombine.high %v1031, 0.0
          %v1042 = vcombine.high %v1038, 0.0
          %vm1043 = vcmask 261120
          %v1045 = vsel %vm1043, %v859, 0
          %v1048 = vsel %vm1043, %v937, 0
          %1050 = vmatprep.subr.mxu0 0.0
          %1051 = vmatpush1.xpose.msra.mxu0 %v1048
          %1052 = vmatprep.subr.mxu0 0.0
          %1053 = vmatpush1.xpose.msra.mxu0 0.0
          %1054 = vmatprep.subr.mxu0 0.0
          %1055 = vmatpush1.xpose.msra.mxu0 0.0
          %1056 = vmatprep.subr.mxu0 0.0
          %1057 = vmatpush1.xpose.msra.mxu0 0.0
          %1058 = vmatprep.subr.mxu0 0.0
          %1059 = vmatpush1.xpose.msra.mxu0 0.0
          %1060 = vmatprep.subr.mxu0 0.0
          %1061 = vmatpush1.xpose.msra.mxu0 0.0
          %1062 = vmatprep.subr.mxu0 0.0
          %1063 = vmatpush1.xpose.msra.mxu0 0.0
          %1064 = vmatprep.subr.mxu0 0.0
          %1065 = vmatpush1.xpose.msra.mxu0 0.0
          %1066 = vmatprep.subr.mxu0 0.0
          %1067 = vmatpush1.xpose.msra.mxu0 0.0
          %1068 = vmatprep.subr.mxu0 0.0
          %1069 = vmatpush1.xpose.msra.mxu0 0.0
          %1070 = vmatprep.subr.mxu0 0.0
          %1071 = vmatpush1.xpose.msra.mxu0 0.0
          %1072 = vmatprep.subr.mxu0 0.0
          %1073 = vmatpush1.xpose.msra.mxu0 0.0
          %1074 = vmatprep.subr.mxu0 0.0
          %1075 = vmatpush1.xpose.msra.mxu0 0.0
          %1076 = vmatprep.subr.mxu0 0.0
          %1077 = vmatpush1.xpose.msra.mxu0 0.0
          %1078 = vmatprep.subr.mxu0 0.0
          %1079 = vmatpush1.xpose.msra.mxu0 0.0
          %1080 = vmatprep.subr.mxu0 0.0
          %1081 = vmatpush1.xpose.msra.mxu0 0.0
          %1082 = vmatprep.subr.mxu0 0.0
          %1083 = vmatpush1.xpose.msra.mxu0 0.0
          %1084 = vmatprep.subr.mxu0 0.0
          %1085 = vmatpush1.xpose.msra.mxu0 0.0
          %1086 = vmatprep.subr.mxu0 0.0
          %1087 = vmatpush1.xpose.msra.mxu0 0.0
          %1088 = vmatprep.subr.mxu0 0.0
          %1089 = vmatpush1.xpose.msra.mxu0 0.0
          %1090 = vmatprep.subr.mxu0 0.0
          %1091 = vmatpush1.xpose.msra.mxu0 0.0
          %1092 = vmatprep.subr.mxu0 0.0
          %1093 = vmatpush1.xpose.msra.mxu0 0.0
          %1094 = vmatprep.subr.mxu0 0.0
          %1095 = vmatpush1.xpose.msra.mxu0 0.0
          %1096 = vmatprep.subr.mxu0 0.0
          %1097 = vmatpush1.xpose.msra.mxu0 0.0
          %1098 = vmatprep.subr.mxu0 0.0
          %1099 = vmatpush1.xpose.msra.mxu0 0.0
          %1100 = vmatprep.subr.mxu0 0.0
          %1101 = vmatpush1.xpose.msra.mxu0 0.0
          %1102 = vmatprep.subr.mxu0 0.0
          %1103 = vmatpush1.xpose.msra.mxu0 0.0
          %1104 = vmatprep.subr.mxu0 0.0
          %1105 = vmatpush1.xpose.msra.mxu0 0.0
          %1106 = vmatprep.subr.mxu0 0.0
          %1107 = vmatpush1.xpose.msra.mxu0 0.0
          %1108 = vmatprep.subr.mxu0 0.0
          %1109 = vmatpush1.xpose.msra.mxu0 0.0
          %1110 = vmatprep.subr.mxu0 0.0
          %1111 = vmatpush1.xpose.msra.mxu0 0.0
          %1112 = vmatprep.subr.mxu0 0.0
          %1113 = vmatpush1.xpose.msra.mxu0 0.0
          %1114 = vmatprep.mubr.f32.mxu0 0.0
          %1115 = vmatmul.mubr.f32.gmra.mrb[0].mxu0 %v1045
          %v1116 = vpop.f32.mrb[0].mxu0
          %v1117 = vadd.f32 0.0, %v1116
          %v1118 = vpop.f32.mrb[0].mxu0
          %1119 = vdwg.mxu0
          %v1121 = vsel %vm1043, %v883, 0
          %v1124 = vsel %vm1043, %v961, 0
          %1126 = vmatprep.subr.mxu0 0.0
          %1127 = vmatpush1.xpose.msra.mxu0 %v1124
          %1128 = vmatprep.subr.mxu0 0.0
          %1129 = vmatpush1.xpose.msra.mxu0 0.0
          %1130 = vmatprep.subr.mxu0 0.0
          %1131 = vmatpush1.xpose.msra.mxu0 0.0
          %1132 = vmatprep.subr.mxu0 0.0
          %1133 = vmatpush1.xpose.msra.mxu0 0.0
          %1134 = vmatprep.subr.mxu0 0.0
          %1135 = vmatpush1.xpose.msra.mxu0 0.0
          %1136 = vmatprep.subr.mxu0 0.0
          %1137 = vmatpush1.xpose.msra.mxu0 0.0
          %1138 = vmatprep.subr.mxu0 0.0
          %1139 = vmatpush1.xpose.msra.mxu0 0.0
          %1140 = vmatprep.subr.mxu0 0.0
          %1141 = vmatpush1.xpose.msra.mxu0 0.0
          %1142 = vmatprep.subr.mxu0 0.0
          %1143 = vmatpush1.xpose.msra.mxu0 0.0
          %1144 = vmatprep.subr.mxu0 0.0
          %1145 = vmatpush1.xpose.msra.mxu0 0.0
          %1146 = vmatprep.subr.mxu0 0.0
          %1147 = vmatpush1.xpose.msra.mxu0 0.0
          %1148 = vmatprep.subr.mxu0 0.0
          %1149 = vmatpush1.xpose.msra.mxu0 0.0
          %1150 = vmatprep.subr.mxu0 0.0
          %1151 = vmatpush1.xpose.msra.mxu0 0.0
          %1152 = vmatprep.subr.mxu0 0.0
          %1153 = vmatpush1.xpose.msra.mxu0 0.0
          %1154 = vmatprep.subr.mxu0 0.0
          %1155 = vmatpush1.xpose.msra.mxu0 0.0
          %1156 = vmatprep.subr.mxu0 0.0
          %1157 = vmatpush1.xpose.msra.mxu0 0.0
          %1158 = vmatprep.subr.mxu0 0.0
          %1159 = vmatpush1.xpose.msra.mxu0 0.0
          %1160 = vmatprep.subr.mxu0 0.0
          %1161 = vmatpush1.xpose.msra.mxu0 0.0
          %1162 = vmatprep.subr.mxu0 0.0
          %1163 = vmatpush1.xpose.msra.mxu0 0.0
          %1164 = vmatprep.subr.mxu0 0.0
          %1165 = vmatpush1.xpose.msra.mxu0 0.0
          %1166 = vmatprep.subr.mxu0 0.0
          %1167 = vmatpush1.xpose.msra.mxu0 0.0
          %1168 = vmatprep.subr.mxu0 0.0
          %1169 = vmatpush1.xpose.msra.mxu0 0.0
          %1170 = vmatprep.subr.mxu0 0.0
          %1171 = vmatpush1.xpose.msra.mxu0 0.0
          %1172 = vmatprep.subr.mxu0 0.0
          %1173 = vmatpush1.xpose.msra.mxu0 0.0
          %1174 = vmatprep.subr.mxu0 0.0
          %1175 = vmatpush1.xpose.msra.mxu0 0.0
          %1176 = vmatprep.subr.mxu0 0.0
          %1177 = vmatpush1.xpose.msra.mxu0 0.0
          %1178 = vmatprep.subr.mxu0 0.0
          %1179 = vmatpush1.xpose.msra.mxu0 0.0
          %1180 = vmatprep.subr.mxu0 0.0
          %1181 = vmatpush1.xpose.msra.mxu0 0.0
          %1182 = vmatprep.subr.mxu0 0.0
          %1183 = vmatpush1.xpose.msra.mxu0 0.0
          %1184 = vmatprep.subr.mxu0 0.0
          %1185 = vmatpush1.xpose.msra.mxu0 0.0
          %1186 = vmatprep.subr.mxu0 0.0
          %1187 = vmatpush1.xpose.msra.mxu0 0.0
          %1188 = vmatprep.subr.mxu0 0.0
          %1189 = vmatpush1.xpose.msra.mxu0 0.0
          %1190 = vmatprep.mubr.f32.mxu0 0.0
          %1191 = vmatmul.mubr.f32.gmra.mrb[0].mxu0 %v1121
          %v1192 = vpop.f32.mrb[0].mxu0
          %v1193 = vadd.f32 0.0, %v1192
          %v1194 = vpop.f32.mrb[0].mxu0
          %1195 = vdwg.mxu0
          %v1197 = vsel %vm1043, %v866, 0
          %v1200 = vsel %vm1043, %v944, 0
          %1202 = vmatprep.subr.mxu0 0.0
          %1203 = vmatpush1.xpose.msra.mxu0 %v1200
          %1204 = vmatprep.subr.mxu0 0.0
          %1205 = vmatpush1.xpose.msra.mxu0 0.0
          %1206 = vmatprep.subr.mxu0 0.0
          %1207 = vmatpush1.xpose.msra.mxu0 0.0
          %1208 = vmatprep.subr.mxu0 0.0
          %1209 = vmatpush1.xpose.msra.mxu0 0.0
          %1210 = vmatprep.subr.mxu0 0.0
          %1211 = vmatpush1.xpose.msra.mxu0 0.0
          %1212 = vmatprep.subr.mxu0 0.0
          %1213 = vmatpush1.xpose.msra.mxu0 0.0
          %1214 = vmatprep.subr.mxu0 0.0
          %1215 = vmatpush1.xpose.msra.mxu0 0.0
          %1216 = vmatprep.subr.mxu0 0.0
          %1217 = vmatpush1.xpose.msra.mxu0 0.0
          %1218 = vmatprep.subr.mxu0 0.0
          %1219 = vmatpush1.xpose.msra.mxu0 0.0
          %1220 = vmatprep.subr.mxu0 0.0
          %1221 = vmatpush1.xpose.msra.mxu0 0.0
          %1222 = vmatprep.subr.mxu0 0.0
          %1223 = vmatpush1.xpose.msra.mxu0 0.0
          %1224 = vmatprep.subr.mxu0 0.0
          %1225 = vmatpush1.xpose.msra.mxu0 0.0
          %1226 = vmatprep.subr.mxu0 0.0
          %1227 = vmatpush1.xpose.msra.mxu0 0.0
          %1228 = vmatprep.subr.mxu0 0.0
          %1229 = vmatpush1.xpose.msra.mxu0 0.0
          %1230 = vmatprep.subr.mxu0 0.0
          %1231 = vmatpush1.xpose.msra.mxu0 0.0
          %1232 = vmatprep.subr.mxu0 0.0
          %1233 = vmatpush1.xpose.msra.mxu0 0.0
          %1234 = vmatprep.subr.mxu0 0.0
          %1235 = vmatpush1.xpose.msra.mxu0 0.0
          %1236 = vmatprep.subr.mxu0 0.0
          %1237 = vmatpush1.xpose.msra.mxu0 0.0
          %1238 = vmatprep.subr.mxu0 0.0
          %1239 = vmatpush1.xpose.msra.mxu0 0.0
          %1240 = vmatprep.subr.mxu0 0.0
          %1241 = vmatpush1.xpose.msra.mxu0 0.0
          %1242 = vmatprep.subr.mxu0 0.0
          %1243 = vmatpush1.xpose.msra.mxu0 0.0
          %1244 = vmatprep.subr.mxu0 0.0
          %1245 = vmatpush1.xpose.msra.mxu0 0.0
          %1246 = vmatprep.subr.mxu0 0.0
          %1247 = vmatpush1.xpose.msra.mxu0 0.0
          %1248 = vmatprep.subr.mxu0 0.0
          %1249 = vmatpush1.xpose.msra.mxu0 0.0
          %1250 = vmatprep.subr.mxu0 0.0
          %1251 = vmatpush1.xpose.msra.mxu0 0.0
          %1252 = vmatprep.subr.mxu0 0.0
          %1253 = vmatpush1.xpose.msra.mxu0 0.0
          %1254 = vmatprep.subr.mxu0 0.0
          %1255 = vmatpush1.xpose.msra.mxu0 0.0
          %1256 = vmatprep.subr.mxu0 0.0
          %1257 = vmatpush1.xpose.msra.mxu0 0.0
          %1258 = vmatprep.subr.mxu0 0.0
          %1259 = vmatpush1.xpose.msra.mxu0 0.0
          %1260 = vmatprep.subr.mxu0 0.0
          %1261 = vmatpush1.xpose.msra.mxu0 0.0
          %1262 = vmatprep.subr.mxu0 0.0
          %1263 = vmatpush1.xpose.msra.mxu0 0.0
          %1264 = vmatprep.subr.mxu0 0.0
          %1265 = vmatpush1.xpose.msra.mxu0 0.0
          %1266 = vmatprep.mubr.f32.mxu0 0.0
          %1267 = vmatmul.mubr.f32.gmra.mrb[0].mxu0 %v1197
          %v1268 = vpop.f32.mrb[0].mxu0
          %v1269 = vadd.f32 0.0, %v1268
          %v1270 = vpop.f32.mrb[0].mxu0
          %1271 = vdwg.mxu0
          %v1273 = vsel %vm1043, %v884, 0
          %v1276 = vsel %vm1043, %v962, 0
          %1278 = vmatprep.subr.mxu0 0.0
          %1279 = vmatpush1.xpose.msra.mxu0 %v1276
          %1280 = vmatprep.subr.mxu0 0.0
          %1281 = vmatpush1.xpose.msra.mxu0 0.0
          %1282 = vmatprep.subr.mxu0 0.0
          %1283 = vmatpush1.xpose.msra.mxu0 0.0
          %1284 = vmatprep.subr.mxu0 0.0
          %1285 = vmatpush1.xpose.msra.mxu0 0.0
          %1286 = vmatprep.subr.mxu0 0.0
          %1287 = vmatpush1.xpose.msra.mxu0 0.0
          %1288 = vmatprep.subr.mxu0 0.0
          %1289 = vmatpush1.xpose.msra.mxu0 0.0
          %1290 = vmatprep.subr.mxu0 0.0
          %1291 = vmatpush1.xpose.msra.mxu0 0.0
          %1292 = vmatprep.subr.mxu0 0.0
          %1293 = vmatpush1.xpose.msra.mxu0 0.0
          %1294 = vmatprep.subr.mxu0 0.0
          %1295 = vmatpush1.xpose.msra.mxu0 0.0
          %1296 = vmatprep.subr.mxu0 0.0
          %1297 = vmatpush1.xpose.msra.mxu0 0.0
          %1298 = vmatprep.subr.mxu0 0.0
          %1299 = vmatpush1.xpose.msra.mxu0 0.0
          %1300 = vmatprep.subr.mxu0 0.0
          %1301 = vmatpush1.xpose.msra.mxu0 0.0
          %1302 = vmatprep.subr.mxu0 0.0
          %1303 = vmatpush1.xpose.msra.mxu0 0.0
          %1304 = vmatprep.subr.mxu0 0.0
          %1305 = vmatpush1.xpose.msra.mxu0 0.0
          %1306 = vmatprep.subr.mxu0 0.0
          %1307 = vmatpush1.xpose.msra.mxu0 0.0
          %1308 = vmatprep.subr.mxu0 0.0
          %1309 = vmatpush1.xpose.msra.mxu0 0.0
          %1310 = vmatprep.subr.mxu0 0.0
          %1311 = vmatpush1.xpose.msra.mxu0 0.0
          %1312 = vmatprep.subr.mxu0 0.0
          %1313 = vmatpush1.xpose.msra.mxu0 0.0
          %1314 = vmatprep.subr.mxu0 0.0
          %1315 = vmatpush1.xpose.msra.mxu0 0.0
          %1316 = vmatprep.subr.mxu0 0.0
          %1317 = vmatpush1.xpose.msra.mxu0 0.0
          %1318 = vmatprep.subr.mxu0 0.0
          %1319 = vmatpush1.xpose.msra.mxu0 0.0
          %1320 = vmatprep.subr.mxu0 0.0
          %1321 = vmatpush1.xpose.msra.mxu0 0.0
          %1322 = vmatprep.subr.mxu0 0.0
          %1323 = vmatpush1.xpose.msra.mxu0 0.0
          %1324 = vmatprep.subr.mxu0 0.0
          %1325 = vmatpush1.xpose.msra.mxu0 0.0
          %1326 = vmatprep.subr.mxu0 0.0
          %1327 = vmatpush1.xpose.msra.mxu0 0.0
          %1328 = vmatprep.subr.mxu0 0.0
          %1329 = vmatpush1.xpose.msra.mxu0 0.0
          %1330 = vmatprep.subr.mxu0 0.0
          %1331 = vmatpush1.xpose.msra.mxu0 0.0
          %1332 = vmatprep.subr.mxu0 0.0
          %1333 = vmatpush1.xpose.msra.mxu0 0.0
          %1334 = vmatprep.subr.mxu0 0.0
          %1335 = vmatpush1.xpose.msra.mxu0 0.0
          %1336 = vmatprep.subr.mxu0 0.0
          %1337 = vmatpush1.xpose.msra.mxu0 0.0
          %1338 = vmatprep.subr.mxu0 0.0
          %1339 = vmatpush1.xpose.msra.mxu0 0.0
          %1340 = vmatprep.subr.mxu0 0.0
          %1341 = vmatpush1.xpose.msra.mxu0 0.0
          %1342 = vmatprep.mubr.f32.mxu0 0.0
          %1343 = vmatmul.mubr.f32.gmra.mrb[0].mxu0 %v1273
          %v1344 = vpop.f32.mrb[0].mxu0
          %v1345 = vadd.f32 0.0, %v1344
          %v1346 = vpop.f32.mrb[0].mxu0
          %1347 = vdwg.mxu0
          %v1349 = vsel %vm1043, %v875, 0
          %v1352 = vsel %vm1043, %v953, 0
          %1354 = vmatprep.subr.mxu0 0.0
          %1355 = vmatpush1.xpose.msra.mxu0 %v1352
          %1356 = vmatprep.subr.mxu0 0.0
          %1357 = vmatpush1.xpose.msra.mxu0 0.0
          %1358 = vmatprep.subr.mxu0 0.0
          %1359 = vmatpush1.xpose.msra.mxu0 0.0
          %1360 = vmatprep.subr.mxu0 0.0
          %1361 = vmatpush1.xpose.msra.mxu0 0.0
          %1362 = vmatprep.subr.mxu0 0.0
          %1363 = vmatpush1.xpose.msra.mxu0 0.0
          %1364 = vmatprep.subr.mxu0 0.0
          %1365 = vmatpush1.xpose.msra.mxu0 0.0
          %1366 = vmatprep.subr.mxu0 0.0
          %1367 = vmatpush1.xpose.msra.mxu0 0.0
          %1368 = vmatprep.subr.mxu0 0.0
          %1369 = vmatpush1.xpose.msra.mxu0 0.0
          %1370 = vmatprep.subr.mxu0 0.0
          %1371 = vmatpush1.xpose.msra.mxu0 0.0
          %1372 = vmatprep.subr.mxu0 0.0
          %1373 = vmatpush1.xpose.msra.mxu0 0.0
          %1374 = vmatprep.subr.mxu0 0.0
          %1375 = vmatpush1.xpose.msra.mxu0 0.0
          %1376 = vmatprep.subr.mxu0 0.0
          %1377 = vmatpush1.xpose.msra.mxu0 0.0
          %1378 = vmatprep.subr.mxu0 0.0
          %1379 = vmatpush1.xpose.msra.mxu0 0.0
          %1380 = vmatprep.subr.mxu0 0.0
          %1381 = vmatpush1.xpose.msra.mxu0 0.0
          %1382 = vmatprep.subr.mxu0 0.0
          %1383 = vmatpush1.xpose.msra.mxu0 0.0
          %1384 = vmatprep.subr.mxu0 0.0
          %1385 = vmatpush1.xpose.msra.mxu0 0.0
          %1386 = vmatprep.subr.mxu0 0.0
          %1387 = vmatpush1.xpose.msra.mxu0 0.0
          %1388 = vmatprep.subr.mxu0 0.0
          %1389 = vmatpush1.xpose.msra.mxu0 0.0
          %1390 = vmatprep.subr.mxu0 0.0
          %1391 = vmatpush1.xpose.msra.mxu0 0.0
          %1392 = vmatprep.subr.mxu0 0.0
          %1393 = vmatpush1.xpose.msra.mxu0 0.0
          %1394 = vmatprep.subr.mxu0 0.0
          %1395 = vmatpush1.xpose.msra.mxu0 0.0
          %1396 = vmatprep.subr.mxu0 0.0
          %1397 = vmatpush1.xpose.msra.mxu0 0.0
          %1398 = vmatprep.subr.mxu0 0.0
          %1399 = vmatpush1.xpose.msra.mxu0 0.0
          %1400 = vmatprep.subr.mxu0 0.0
          %1401 = vmatpush1.xpose.msra.mxu0 0.0
          %1402 = vmatprep.subr.mxu0 0.0
          %1403 = vmatpush1.xpose.msra.mxu0 0.0
          %1404 = vmatprep.subr.mxu0 0.0
          %1405 = vmatpush1.xpose.msra.mxu0 0.0
          %1406 = vmatprep.subr.mxu0 0.0
          %1407 = vmatpush1.xpose.msra.mxu0 0.0
          %1408 = vmatprep.subr.mxu0 0.0
          %1409 = vmatpush1.xpose.msra.mxu0 0.0
          %1410 = vmatprep.subr.mxu0 0.0
          %1411 = vmatpush1.xpose.msra.mxu0 0.0
          %1412 = vmatprep.subr.mxu0 0.0
          %1413 = vmatpush1.xpose.msra.mxu0 0.0
          %1414 = vmatprep.subr.mxu0 0.0
          %1415 = vmatpush1.xpose.msra.mxu0 0.0
          %1416 = vmatprep.subr.mxu0 0.0
          %1417 = vmatpush1.xpose.msra.mxu0 0.0
          %1418 = vmatprep.mubr.f32.mxu0 0.0
          %1419 = vmatmul.mubr.f32.gmra.mrb[0].mxu0 %v1349
          %v1420 = vpop.f32.mrb[0].mxu0
          %v1421 = vadd.f32 0.0, %v1420
          %v1422 = vpop.f32.mrb[0].mxu0
          %1423 = vdwg.mxu0
          %v1425 = vsel %vm1043, %v885, 0
          %v1428 = vsel %vm1043, %v963, 0
          %1430 = vmatprep.subr.mxu0 0.0
          %1431 = vmatpush1.xpose.msra.mxu0 %v1428
          %1432 = vmatprep.subr.mxu0 0.0
          %1433 = vmatpush1.xpose.msra.mxu0 0.0
          %1434 = vmatprep.subr.mxu0 0.0
          %1435 = vmatpush1.xpose.msra.mxu0 0.0
          %1436 = vmatprep.subr.mxu0 0.0
          %1437 = vmatpush1.xpose.msra.mxu0 0.0
          %1438 = vmatprep.subr.mxu0 0.0
          %1439 = vmatpush1.xpose.msra.mxu0 0.0
          %1440 = vmatprep.subr.mxu0 0.0
          %1441 = vmatpush1.xpose.msra.mxu0 0.0
          %1442 = vmatprep.subr.mxu0 0.0
          %1443 = vmatpush1.xpose.msra.mxu0 0.0
          %1444 = vmatprep.subr.mxu0 0.0
          %1445 = vmatpush1.xpose.msra.mxu0 0.0
          %1446 = vmatprep.subr.mxu0 0.0
          %1447 = vmatpush1.xpose.msra.mxu0 0.0
          %1448 = vmatprep.subr.mxu0 0.0
          %1449 = vmatpush1.xpose.msra.mxu0 0.0
          %1450 = vmatprep.subr.mxu0 0.0
          %1451 = vmatpush1.xpose.msra.mxu0 0.0
          %1452 = vmatprep.subr.mxu0 0.0
          %1453 = vmatpush1.xpose.msra.mxu0 0.0
          %1454 = vmatprep.subr.mxu0 0.0
          %1455 = vmatpush1.xpose.msra.mxu0 0.0
          %1456 = vmatprep.subr.mxu0 0.0
          %1457 = vmatpush1.xpose.msra.mxu0 0.0
          %1458 = vmatprep.subr.mxu0 0.0
          %1459 = vmatpush1.xpose.msra.mxu0 0.0
          %1460 = vmatprep.subr.mxu0 0.0
          %1461 = vmatpush1.xpose.msra.mxu0 0.0
          %1462 = vmatprep.subr.mxu0 0.0
          %1463 = vmatpush1.xpose.msra.mxu0 0.0
          %1464 = vmatprep.subr.mxu0 0.0
          %1465 = vmatpush1.xpose.msra.mxu0 0.0
          %1466 = vmatprep.subr.mxu0 0.0
          %1467 = vmatpush1.xpose.msra.mxu0 0.0
          %1468 = vmatprep.subr.mxu0 0.0
          %1469 = vmatpush1.xpose.msra.mxu0 0.0
          %1470 = vmatprep.subr.mxu0 0.0
          %1471 = vmatpush1.xpose.msra.mxu0 0.0
          %1472 = vmatprep.subr.mxu0 0.0
          %1473 = vmatpush1.xpose.msra.mxu0 0.0
          %1474 = vmatprep.subr.mxu0 0.0
          %1475 = vmatpush1.xpose.msra.mxu0 0.0
          %1476 = vmatprep.subr.mxu0 0.0
          %1477 = vmatpush1.xpose.msra.mxu0 0.0
          %1478 = vmatprep.subr.mxu0 0.0
          %1479 = vmatpush1.xpose.msra.mxu0 0.0
          %1480 = vmatprep.subr.mxu0 0.0
          %1481 = vmatpush1.xpose.msra.mxu0 0.0
          %1482 = vmatprep.subr.mxu0 0.0
          %1483 = vmatpush1.xpose.msra.mxu0 0.0
          %1484 = vmatprep.subr.mxu0 0.0
          %1485 = vmatpush1.xpose.msra.mxu0 0.0
          %1486 = vmatprep.subr.mxu0 0.0
          %1487 = vmatpush1.xpose.msra.mxu0 0.0
          %1488 = vmatprep.subr.mxu0 0.0
          %1489 = vmatpush1.xpose.msra.mxu0 0.0
          %1490 = vmatprep.subr.mxu0 0.0
          %1491 = vmatpush1.xpose.msra.mxu0 0.0
          %1492 = vmatprep.subr.mxu0 0.0
          %1493 = vmatpush1.xpose.msra.mxu0 0.0
          %1494 = vmatprep.mubr.f32.mxu0 0.0
          %1495 = vmatmul.mubr.f32.gmra.mrb[0].mxu0 %v1425
          %v1496 = vpop.f32.mrb[0].mxu0
          %v1497 = vadd.f32 0.0, %v1496
          %v1498 = vpop.f32.mrb[0].mxu0
          %1499 = vdwg.mxu0
          %v1501 = vsel %vm1043, %v882, 0
          %v1504 = vsel %vm1043, %v960, 0
          %1506 = vmatprep.subr.mxu0 0.0
          %1507 = vmatpush1.xpose.msra.mxu0 %v1504
          %1508 = vmatprep.subr.mxu0 0.0
          %1509 = vmatpush1.xpose.msra.mxu0 0.0
          %1510 = vmatprep.subr.mxu0 0.0
          %1511 = vmatpush1.xpose.msra.mxu0 0.0
          %1512 = vmatprep.subr.mxu0 0.0
          %1513 = vmatpush1.xpose.msra.mxu0 0.0
          %1514 = vmatprep.subr.mxu0 0.0
          %1515 = vmatpush1.xpose.msra.mxu0 0.0
          %1516 = vmatprep.subr.mxu0 0.0
          %1517 = vmatpush1.xpose.msra.mxu0 0.0
          %1518 = vmatprep.subr.mxu0 0.0
          %1519 = vmatpush1.xpose.msra.mxu0 0.0
          %1520 = vmatprep.subr.mxu0 0.0
          %1521 = vmatpush1.xpose.msra.mxu0 0.0
          %1522 = vmatprep.subr.mxu0 0.0
          %1523 = vmatpush1.xpose.msra.mxu0 0.0
          %1524 = vmatprep.subr.mxu0 0.0
          %1525 = vmatpush1.xpose.msra.mxu0 0.0
          %1526 = vmatprep.subr.mxu0 0.0
          %1527 = vmatpush1.xpose.msra.mxu0 0.0
          %1528 = vmatprep.subr.mxu0 0.0
          %1529 = vmatpush1.xpose.msra.mxu0 0.0
          %1530 = vmatprep.subr.mxu0 0.0
          %1531 = vmatpush1.xpose.msra.mxu0 0.0
          %1532 = vmatprep.subr.mxu0 0.0
          %1533 = vmatpush1.xpose.msra.mxu0 0.0
          %1534 = vmatprep.subr.mxu0 0.0
          %1535 = vmatpush1.xpose.msra.mxu0 0.0
          %1536 = vmatprep.subr.mxu0 0.0
          %1537 = vmatpush1.xpose.msra.mxu0 0.0
          %1538 = vmatprep.subr.mxu0 0.0
          %1539 = vmatpush1.xpose.msra.mxu0 0.0
          %1540 = vmatprep.subr.mxu0 0.0
          %1541 = vmatpush1.xpose.msra.mxu0 0.0
          %1542 = vmatprep.subr.mxu0 0.0
          %1543 = vmatpush1.xpose.msra.mxu0 0.0
          %1544 = vmatprep.subr.mxu0 0.0
          %1545 = vmatpush1.xpose.msra.mxu0 0.0
          %1546 = vmatprep.subr.mxu0 0.0
          %1547 = vmatpush1.xpose.msra.mxu0 0.0
          %1548 = vmatprep.subr.mxu0 0.0
          %1549 = vmatpush1.xpose.msra.mxu0 0.0
          %1550 = vmatprep.subr.mxu0 0.0
          %1551 = vmatpush1.xpose.msra.mxu0 0.0
          %1552 = vmatprep.subr.mxu0 0.0
          %1553 = vmatpush1.xpose.msra.mxu0 0.0
          %1554 = vmatprep.subr.mxu0 0.0
          %1555 = vmatpush1.xpose.msra.mxu0 0.0
          %1556 = vmatprep.subr.mxu0 0.0
          %1557 = vmatpush1.xpose.msra.mxu0 0.0
          %1558 = vmatprep.subr.mxu0 0.0
          %1559 = vmatpush1.xpose.msra.mxu0 0.0
          %1560 = vmatprep.subr.mxu0 0.0
          %1561 = vmatpush1.xpose.msra.mxu0 0.0
          %1562 = vmatprep.subr.mxu0 0.0
          %1563 = vmatpush1.xpose.msra.mxu0 0.0
          %1564 = vmatprep.subr.mxu0 0.0
          %1565 = vmatpush1.xpose.msra.mxu0 0.0
          %1566 = vmatprep.subr.mxu0 0.0
          %1567 = vmatpush1.xpose.msra.mxu0 0.0
          %1568 = vmatprep.subr.mxu0 0.0
          %1569 = vmatpush1.xpose.msra.mxu0 0.0
          %1570 = vmatprep.mubr.f32.mxu0 0.0
          %1571 = vmatmul.mubr.f32.gmra.mrb[0].mxu0 %v1501
          %v1572 = vpop.f32.mrb[0].mxu0
          %v1573 = vadd.f32 0.0, %v1572
          %v1574 = vpop.f32.mrb[0].mxu0
          %1575 = vdwg.mxu0
          %v1577 = vsel %vm1043, %v886, 0
          %v1580 = vsel %vm1043, %v964, 0
          %1582 = vmatprep.subr.mxu0 0.0
          %1583 = vmatpush1.xpose.msra.mxu0 %v1580
          %1584 = vmatprep.subr.mxu0 0.0
          %1585 = vmatpush1.xpose.msra.mxu0 0.0
          %1586 = vmatprep.subr.mxu0 0.0
          %1587 = vmatpush1.xpose.msra.mxu0 0.0
          %1588 = vmatprep.subr.mxu0 0.0
          %1589 = vmatpush1.xpose.msra.mxu0 0.0
          %1590 = vmatprep.subr.mxu0 0.0
          %1591 = vmatpush1.xpose.msra.mxu0 0.0
          %1592 = vmatprep.subr.mxu0 0.0
          %1593 = vmatpush1.xpose.msra.mxu0 0.0
          %1594 = vmatprep.subr.mxu0 0.0
          %1595 = vmatpush1.xpose.msra.mxu0 0.0
          %1596 = vmatprep.subr.mxu0 0.0
          %1597 = vmatpush1.xpose.msra.mxu0 0.0
          %1598 = vmatprep.subr.mxu0 0.0
          %1599 = vmatpush1.xpose.msra.mxu0 0.0
          %1600 = vmatprep.subr.mxu0 0.0
          %1601 = vmatpush1.xpose.msra.mxu0 0.0
          %1602 = vmatprep.subr.mxu0 0.0
          %1603 = vmatpush1.xpose.msra.mxu0 0.0
          %1604 = vmatprep.subr.mxu0 0.0
          %1605 = vmatpush1.xpose.msra.mxu0 0.0
          %1606 = vmatprep.subr.mxu0 0.0
          %1607 = vmatpush1.xpose.msra.mxu0 0.0
          %1608 = vmatprep.subr.mxu0 0.0
          %1609 = vmatpush1.xpose.msra.mxu0 0.0
          %1610 = vmatprep.subr.mxu0 0.0
          %1611 = vmatpush1.xpose.msra.mxu0 0.0
          %1612 = vmatprep.subr.mxu0 0.0
          %1613 = vmatpush1.xpose.msra.mxu0 0.0
          %1614 = vmatprep.subr.mxu0 0.0
          %1615 = vmatpush1.xpose.msra.mxu0 0.0
          %1616 = vmatprep.subr.mxu0 0.0
          %1617 = vmatpush1.xpose.msra.mxu0 0.0
          %1618 = vmatprep.subr.mxu0 0.0
          %1619 = vmatpush1.xpose.msra.mxu0 0.0
          %1620 = vmatprep.subr.mxu0 0.0
          %1621 = vmatpush1.xpose.msra.mxu0 0.0
          %1622 = vmatprep.subr.mxu0 0.0
          %1623 = vmatpush1.xpose.msra.mxu0 0.0
          %1624 = vmatprep.subr.mxu0 0.0
          %1625 = vmatpush1.xpose.msra.mxu0 0.0
          %1626 = vmatprep.subr.mxu0 0.0
          %1627 = vmatpush1.xpose.msra.mxu0 0.0
          %1628 = vmatprep.subr.mxu0 0.0
          %1629 = vmatpush1.xpose.msra.mxu0 0.0
          %1630 = vmatprep.subr.mxu0 0.0
          %1631 = vmatpush1.xpose.msra.mxu0 0.0
          %1632 = vmatprep.subr.mxu0 0.0
          %1633 = vmatpush1.xpose.msra.mxu0 0.0
          %1634 = vmatprep.subr.mxu0 0.0
          %1635 = vmatpush1.xpose.msra.mxu0 0.0
          %1636 = vmatprep.subr.mxu0 0.0
          %1637 = vmatpush1.xpose.msra.mxu0 0.0
          %1638 = vmatprep.subr.mxu0 0.0
          %1639 = vmatpush1.xpose.msra.mxu0 0.0
          %1640 = vmatprep.subr.mxu0 0.0
          %1641 = vmatpush1.xpose.msra.mxu0 0.0
          %1642 = vmatprep.subr.mxu0 0.0
          %1643 = vmatpush1.xpose.msra.mxu0 0.0
          %1644 = vmatprep.subr.mxu0 0.0
          %1645 = vmatpush1.xpose.msra.mxu0 0.0
          %1646 = vmatprep.mubr.f32.mxu0 0.0
          %1647 = vmatmul.mubr.f32.gmra.mrb[0].mxu0 %v1577
          %v1648 = vpop.f32.mrb[0].mxu0
          %v1649 = vadd.f32 0.0, %v1648
          %v1650 = vpop.f32.mrb[0].mxu0
          %1651 = vdwg.mxu0
          %v1652 = vmul.f32 %v1117, 0.25
          %v1653 = vmul.f32 %v1193, 0.25
          %v1654 = vmul.f32 %v1269, 0.25
          %v1655 = vmul.f32 %v1345, 0.25
          %v1656 = vmul.f32 %v1421, 0.25
          %v1657 = vmul.f32 %v1497, 0.25
          %v1658 = vmul.f32 %v1573, 0.25
          %v1659 = vmul.f32 %v1649, 0.25
          %vm1660 = vcmask 27648
          %v1661 = vsel %vm1660, %v1652, -inf
          %1662 = vmax.xlane.f32.xlu0 %v1661
          %v1663 = vpop.xlane.xlu0 %1662
          %v1664 = vsel %vm1660, %v1653, -inf
          %1665 = vmax.xlane.f32.xlu0 %v1664
          %v1666 = vpop.xlane.xlu0 %1665
          %v1667 = vsel %vm1660, %v1654, -inf
          %1668 = vmax.xlane.f32.xlu0 %v1667
          %v1669 = vpop.xlane.xlu0 %1668
          %v1670 = vsel %vm1660, %v1655, -inf
          %1671 = vmax.xlane.f32.xlu0 %v1670
          %v1672 = vpop.xlane.xlu0 %1671
          %v1673 = vsel %vm1660, %v1656, -inf
          %1674 = vmax.xlane.f32.xlu0 %v1673
          %v1675 = vpop.xlane.xlu0 %1674
          %v1676 = vsel %vm1660, %v1657, -inf
          %1677 = vmax.xlane.f32.xlu0 %v1676
          %v1678 = vpop.xlane.xlu0 %1677
          %v1679 = vsel %vm1660, %v1658, -inf
          %1680 = vmax.xlane.f32.xlu0 %v1679
          %v1681 = vpop.xlane.xlu0 %1680
          %v1682 = vsel %vm1660, %v1659, -inf
          %1683 = vmax.xlane.f32.xlu0 %v1682
          %v1684 = vpop.xlane.xlu0 %1683
          %v1685 = vsub.f32 %v1652, %v1663
          %v1686 = vsub.f32 %v1653, %v1666
          %v1687 = vsub.f32 %v1654, %v1669
          %v1688 = vsub.f32 %v1655, %v1672
          %v1689 = vsub.f32 %v1656, %v1675
          %v1690 = vsub.f32 %v1657, %v1678
          %v1691 = vsub.f32 %v1658, %v1681
          %v1692 = vsub.f32 %v1659, %v1684
          %v1693 = vmul.f32 %v1685, 1.442695
          %v1694 = vpow.pop %v1693
          %v1695 = vmul.f32 %v1686, 1.442695
          %v1696 = vpow.pop %v1695
          %v1697 = vmul.f32 %v1687, 1.442695
          %v1698 = vpow.pop %v1697
          %v1699 = vmul.f32 %v1688, 1.442695
          %v1700 = vpow.pop %v1699
          %v1701 = vmul.f32 %v1689, 1.442695
          %v1702 = vpow.pop %v1701
          %v1703 = vmul.f32 %v1690, 1.442695
          %v1704 = vpow.pop %v1703
          %v1705 = vmul.f32 %v1691, 1.442695
          %v1706 = vpow.pop %v1705
          %v1707 = vmul.f32 %v1692, 1.442695
          %v1708 = vpow.pop %v1707
          %v1709 = vsel %vm1660, %v1694, 0.0
          %1710 = vadd.xlane.f32.xlu0 %v1709
          %v1711 = vpop.xlane.xlu0 %1710
          %v1712 = vsel %vm1660, %v1696, 0.0
          %1713 = vadd.xlane.f32.xlu0 %v1712
          %v1714 = vpop.xlane.xlu0 %1713
          %v1715 = vsel %vm1660, %v1698, 0.0
          %1716 = vadd.xlane.f32.xlu0 %v1715
          %v1717 = vpop.xlane.xlu0 %1716
          %v1718 = vsel %vm1660, %v1700, 0.0
          %1719 = vadd.xlane.f32.xlu0 %v1718
          %v1720 = vpop.xlane.xlu0 %1719
          %v1721 = vsel %vm1660, %v1702, 0.0
          %1722 = vadd.xlane.f32.xlu0 %v1721
          %v1723 = vpop.xlane.xlu0 %1722
          %v1724 = vsel %vm1660, %v1704, 0.0
          %1725 = vadd.xlane.f32.xlu0 %v1724
          %v1726 = vpop.xlane.xlu0 %1725
          %v1727 = vsel %vm1660, %v1706, 0.0
          %1728 = vadd.xlane.f32.xlu0 %v1727
          %v1729 = vpop.xlane.xlu0 %1728
          %v1730 = vsel %vm1660, %v1708, 0.0
          %1731 = vadd.xlane.f32.xlu0 %v1730
          %v1732 = vpop.xlane.xlu0 %1731
          %v1733 = vrcp.pop %v1711
          %v1734 = vmul.f32 %v1694, %v1733
          %v1735 = vrcp.pop %v1714
          %v1736 = vmul.f32 %v1696, %v1735
          %v1737 = vrcp.pop %v1717
          %v1738 = vmul.f32 %v1698, %v1737
          %v1739 = vrcp.pop %v1720
          %v1740 = vmul.f32 %v1700, %v1739
          %v1741 = vrcp.pop %v1723
          %v1742 = vmul.f32 %v1702, %v1741
          %v1743 = vrcp.pop %v1726
          %v1744 = vmul.f32 %v1704, %v1743
          %v1745 = vrcp.pop %v1729
          %v1746 = vmul.f32 %v1706, %v1745
          %v1747 = vrcp.pop %v1732
          %v1748 = vmul.f32 %v1708, %v1747
          %vm1749 = vcmask 31744
          %v1751 = vsel %vm1749, %v1734, 0
          %vm1753 = vcmask 1043456
          %v1755 = vsel %vm1753, %v1015, 0
          %1757 = vmatprep.subr.mxu0 0.0
          %1758 = vmatpush1.msra.mxu0 %v1755
          %1759 = vmatprep.subr.mxu0 0.0
          %1760 = vmatpush1.msra.mxu0 0.0
          %1761 = vmatprep.subr.mxu0 0.0
          %1762 = vmatpush1.msra.mxu0 0.0
          %1763 = vmatprep.subr.mxu0 0.0
          %1764 = vmatpush1.msra.mxu0 0.0
          %1765 = vmatprep.subr.mxu0 0.0
          %1766 = vmatpush1.msra.mxu0 0.0
          %1767 = vmatprep.subr.mxu0 0.0
          %1768 = vmatpush1.msra.mxu0 0.0
          %1769 = vmatprep.subr.mxu0 0.0
          %1770 = vmatpush1.msra.mxu0 0.0
          %1771 = vmatprep.subr.mxu0 0.0
          %1772 = vmatpush1.msra.mxu0 0.0
          %1773 = vmatprep.subr.mxu0 0.0
          %1774 = vmatpush1.msra.mxu0 0.0
          %1775 = vmatprep.subr.mxu0 0.0
          %1776 = vmatpush1.msra.mxu0 0.0
          %1777 = vmatprep.subr.mxu0 0.0
          %1778 = vmatpush1.msra.mxu0 0.0
          %1779 = vmatprep.subr.mxu0 0.0
          %1780 = vmatpush1.msra.mxu0 0.0
          %1781 = vmatprep.subr.mxu0 0.0
          %1782 = vmatpush1.msra.mxu0 0.0
          %1783 = vmatprep.subr.mxu0 0.0
          %1784 = vmatpush1.msra.mxu0 0.0
          %1785 = vmatprep.subr.mxu0 0.0
          %1786 = vmatpush1.msra.mxu0 0.0
          %1787 = vmatprep.subr.mxu0 0.0
          %1788 = vmatpush1.msra.mxu0 0.0
          %1789 = vmatprep.subr.mxu0 0.0
          %1790 = vmatpush1.msra.mxu0 0.0
          %1791 = vmatprep.subr.mxu0 0.0
          %1792 = vmatpush1.msra.mxu0 0.0
          %1793 = vmatprep.subr.mxu0 0.0
          %1794 = vmatpush1.msra.mxu0 0.0
          %1795 = vmatprep.subr.mxu0 0.0
          %1796 = vmatpush1.msra.mxu0 0.0
          %1797 = vmatprep.subr.mxu0 0.0
          %1798 = vmatpush1.msra.mxu0 0.0
          %1799 = vmatprep.subr.mxu0 0.0
          %1800 = vmatpush1.msra.mxu0 0.0
          %1801 = vmatprep.subr.mxu0 0.0
          %1802 = vmatpush1.msra.mxu0 0.0
          %1803 = vmatprep.subr.mxu0 0.0
          %1804 = vmatpush1.msra.mxu0 0.0
          %1805 = vmatprep.subr.mxu0 0.0
          %1806 = vmatpush1.msra.mxu0 0.0
          %1807 = vmatprep.subr.mxu0 0.0
          %1808 = vmatpush1.msra.mxu0 0.0
          %1809 = vmatprep.subr.mxu0 0.0
          %1810 = vmatpush1.msra.mxu0 0.0
          %1811 = vmatprep.subr.mxu0 0.0
          %1812 = vmatpush1.msra.mxu0 0.0
          %1813 = vmatprep.subr.mxu0 0.0
          %1814 = vmatpush1.msra.mxu0 0.0
          %1815 = vmatprep.subr.mxu0 0.0
          %1816 = vmatpush1.msra.mxu0 0.0
          %1817 = vmatprep.subr.mxu0 0.0
          %1818 = vmatpush1.msra.mxu0 0.0
          %1819 = vmatprep.subr.mxu0 0.0
          %1820 = vmatpush1.msra.mxu0 0.0
          %1821 = vmatprep.mubr.f32.mxu0 0.0
          %1822 = vmatmul.mubr.f32.gmra.mrb[0].mxu0 %v1751
          %v1823 = vpop.f32.mrb[0].mxu0
          %v1824 = vadd.f32 0.0, %v1823
          %v1825 = vpop.f32.mrb[0].mxu0
          %1826 = vdwg.mxu0
          %v1828 = vsel %vm1749, %v1736, 0
          %v1831 = vsel %vm1753, %v1039, 0
          %1833 = vmatprep.subr.mxu0 0.0
          %1834 = vmatpush1.msra.mxu0 %v1831
          %1835 = vmatprep.subr.mxu0 0.0
          %1836 = vmatpush1.msra.mxu0 0.0
          %1837 = vmatprep.subr.mxu0 0.0
          %1838 = vmatpush1.msra.mxu0 0.0
          %1839 = vmatprep.subr.mxu0 0.0
          %1840 = vmatpush1.msra.mxu0 0.0
          %1841 = vmatprep.subr.mxu0 0.0
          %1842 = vmatpush1.msra.mxu0 0.0
          %1843 = vmatprep.subr.mxu0 0.0
          %1844 = vmatpush1.msra.mxu0 0.0
          %1845 = vmatprep.subr.mxu0 0.0
          %1846 = vmatpush1.msra.mxu0 0.0
          %1847 = vmatprep.subr.mxu0 0.0
          %1848 = vmatpush1.msra.mxu0 0.0
          %1849 = vmatprep.subr.mxu0 0.0
          %1850 = vmatpush1.msra.mxu0 0.0
          %1851 = vmatprep.subr.mxu0 0.0
          %1852 = vmatpush1.msra.mxu0 0.0
          %1853 = vmatprep.subr.mxu0 0.0
          %1854 = vmatpush1.msra.mxu0 0.0
          %1855 = vmatprep.subr.mxu0 0.0
          %1856 = vmatpush1.msra.mxu0 0.0
          %1857 = vmatprep.subr.mxu0 0.0
          %1858 = vmatpush1.msra.mxu0 0.0
          %1859 = vmatprep.subr.mxu0 0.0
          %1860 = vmatpush1.msra.mxu0 0.0
          %1861 = vmatprep.subr.mxu0 0.0
          %1862 = vmatpush1.msra.mxu0 0.0
          %1863 = vmatprep.subr.mxu0 0.0
          %1864 = vmatpush1.msra.mxu0 0.0
          %1865 = vmatprep.subr.mxu0 0.0
          %1866 = vmatpush1.msra.mxu0 0.0
          %1867 = vmatprep.subr.mxu0 0.0
          %1868 = vmatpush1.msra.mxu0 0.0
          %1869 = vmatprep.subr.mxu0 0.0
          %1870 = vmatpush1.msra.mxu0 0.0
          %1871 = vmatprep.subr.mxu0 0.0
          %1872 = vmatpush1.msra.mxu0 0.0
          %1873 = vmatprep.subr.mxu0 0.0
          %1874 = vmatpush1.msra.mxu0 0.0
          %1875 = vmatprep.subr.mxu0 0.0
          %1876 = vmatpush1.msra.mxu0 0.0
          %1877 = vmatprep.subr.mxu0 0.0
          %1878 = vmatpush1.msra.mxu0 0.0
          %1879 = vmatprep.subr.mxu0 0.0
          %1880 = vmatpush1.msra.mxu0 0.0
          %1881 = vmatprep.subr.mxu0 0.0
          %1882 = vmatpush1.msra.mxu0 0.0
          %1883 = vmatprep.subr.mxu0 0.0
          %1884 = vmatpush1.msra.mxu0 0.0
          %1885 = vmatprep.subr.mxu0 0.0
          %1886 = vmatpush1.msra.mxu0 0.0
          %1887 = vmatprep.subr.mxu0 0.0
          %1888 = vmatpush1.msra.mxu0 0.0
          %1889 = vmatprep.subr.mxu0 0.0
          %1890 = vmatpush1.msra.mxu0 0.0
          %1891 = vmatprep.subr.mxu0 0.0
          %1892 = vmatpush1.msra.mxu0 0.0
          %1893 = vmatprep.subr.mxu0 0.0
          %1894 = vmatpush1.msra.mxu0 0.0
          %1895 = vmatprep.subr.mxu0 0.0
          %1896 = vmatpush1.msra.mxu0 0.0
          %1897 = vmatprep.mubr.f32.mxu0 0.0
          %1898 = vmatmul.mubr.f32.gmra.mrb[0].mxu0 %v1828
          %v1899 = vpop.f32.mrb[0].mxu0
          %v1900 = vadd.f32 0.0, %v1899
          %v1901 = vpop.f32.mrb[0].mxu0
          %1902 = vdwg.mxu0
          %v1904 = vsel %vm1749, %v1738, 0
          %v1907 = vsel %vm1753, %v1022, 0
          %1909 = vmatprep.subr.mxu0 0.0
          %1910 = vmatpush1.msra.mxu0 %v1907
          %1911 = vmatprep.subr.mxu0 0.0
          %1912 = vmatpush1.msra.mxu0 0.0
          %1913 = vmatprep.subr.mxu0 0.0
          %1914 = vmatpush1.msra.mxu0 0.0
          %1915 = vmatprep.subr.mxu0 0.0
          %1916 = vmatpush1.msra.mxu0 0.0
          %1917 = vmatprep.subr.mxu0 0.0
          %1918 = vmatpush1.msra.mxu0 0.0
          %1919 = vmatprep.subr.mxu0 0.0
          %1920 = vmatpush1.msra.mxu0 0.0
          %1921 = vmatprep.subr.mxu0 0.0
          %1922 = vmatpush1.msra.mxu0 0.0
          %1923 = vmatprep.subr.mxu0 0.0
          %1924 = vmatpush1.msra.mxu0 0.0
          %1925 = vmatprep.subr.mxu0 0.0
          %1926 = vmatpush1.msra.mxu0 0.0
          %1927 = vmatprep.subr.mxu0 0.0
          %1928 = vmatpush1.msra.mxu0 0.0
          %1929 = vmatprep.subr.mxu0 0.0
          %1930 = vmatpush1.msra.mxu0 0.0
          %1931 = vmatprep.subr.mxu0 0.0
          %1932 = vmatpush1.msra.mxu0 0.0
          %1933 = vmatprep.subr.mxu0 0.0
          %1934 = vmatpush1.msra.mxu0 0.0
          %1935 = vmatprep.subr.mxu0 0.0
          %1936 = vmatpush1.msra.mxu0 0.0
          %1937 = vmatprep.subr.mxu0 0.0
          %1938 = vmatpush1.msra.mxu0 0.0
          %1939 = vmatprep.subr.mxu0 0.0
          %1940 = vmatpush1.msra.mxu0 0.0
          %1941 = vmatprep.subr.mxu0 0.0
          %1942 = vmatpush1.msra.mxu0 0.0
          %1943 = vmatprep.subr.mxu0 0.0
          %1944 = vmatpush1.msra.mxu0 0.0
          %1945 = vmatprep.subr.mxu0 0.0
          %1946 = vmatpush1.msra.mxu0 0.0
          %1947 = vmatprep.subr.mxu0 0.0
          %1948 = vmatpush1.msra.mxu0 0.0
          %1949 = vmatprep.subr.mxu0 0.0
          %1950 = vmatpush1.msra.mxu0 0.0
          %1951 = vmatprep.subr.mxu0 0.0
          %1952 = vmatpush1.msra.mxu0 0.0
          %1953 = vmatprep.subr.mxu0 0.0
          %1954 = vmatpush1.msra.mxu0 0.0
          %1955 = vmatprep.subr.mxu0 0.0
          %1956 = vmatpush1.msra.mxu0 0.0
          %1957 = vmatprep.subr.mxu0 0.0
          %1958 = vmatpush1.msra.mxu0 0.0
          %1959 = vmatprep.subr.mxu0 0.0
          %1960 = vmatpush1.msra.mxu0 0.0
          %1961 = vmatprep.subr.mxu0 0.0
          %1962 = vmatpush1.msra.mxu0 0.0
          %1963 = vmatprep.subr.mxu0 0.0
          %1964 = vmatpush1.msra.mxu0 0.0
          %1965 = vmatprep.subr.mxu0 0.0
          %1966 = vmatpush1.msra.mxu0 0.0
          %1967 = vmatprep.subr.mxu0 0.0
          %1968 = vmatpush1.msra.mxu0 0.0
          %1969 = vmatprep.subr.mxu0 0.0
          %1970 = vmatpush1.msra.mxu0 0.0
          %1971 = vmatprep.subr.mxu0 0.0
          %1972 = vmatpush1.msra.mxu0 0.0
          %1973 = vmatprep.mubr.f32.mxu0 0.0
          %1974 = vmatmul.mubr.f32.gmra.mrb[0].mxu0 %v1904
          %v1975 = vpop.f32.mrb[0].mxu0
          %v1976 = vadd.f32 0.0, %v1975
          %v1977 = vpop.f32.mrb[0].mxu0
          %1978 = vdwg.mxu0
          %v1980 = vsel %vm1749, %v1740, 0
          %v1983 = vsel %vm1753, %v1040, 0
          %1985 = vmatprep.subr.mxu0 0.0
          %1986 = vmatpush1.msra.mxu0 %v1983
          %1987 = vmatprep.subr.mxu0 0.0
          %1988 = vmatpush1.msra.mxu0 0.0
          %1989 = vmatprep.subr.mxu0 0.0
          %1990 = vmatpush1.msra.mxu0 0.0
          %1991 = vmatprep.subr.mxu0 0.0
          %1992 = vmatpush1.msra.mxu0 0.0
          %1993 = vmatprep.subr.mxu0 0.0
          %1994 = vmatpush1.msra.mxu0 0.0
          %1995 = vmatprep.subr.mxu0 0.0
          %1996 = vmatpush1.msra.mxu0 0.0
          %1997 = vmatprep.subr.mxu0 0.0
          %1998 = vmatpush1.msra.mxu0 0.0
          %1999 = vmatprep.subr.mxu0 0.0
          %2000 = vmatpush1.msra.mxu0 0.0
          %2001 = vmatprep.subr.mxu0 0.0
          %2002 = vmatpush1.msra.mxu0 0.0
          %2003 = vmatprep.subr.mxu0 0.0
          %2004 = vmatpush1.msra.mxu0 0.0
          %2005 = vmatprep.subr.mxu0 0.0
          %2006 = vmatpush1.msra.mxu0 0.0
          %2007 = vmatprep.subr.mxu0 0.0
          %2008 = vmatpush1.msra.mxu0 0.0
          %2009 = vmatprep.subr.mxu0 0.0
          %2010 = vmatpush1.msra.mxu0 0.0
          %2011 = vmatprep.subr.mxu0 0.0
          %2012 = vmatpush1.msra.mxu0 0.0
          %2013 = vmatprep.subr.mxu0 0.0
          %2014 = vmatpush1.msra.mxu0 0.0
          %2015 = vmatprep.subr.mxu0 0.0
          %2016 = vmatpush1.msra.mxu0 0.0
          %2017 = vmatprep.subr.mxu0 0.0
          %2018 = vmatpush1.msra.mxu0 0.0
          %2019 = vmatprep.subr.mxu0 0.0
          %2020 = vmatpush1.msra.mxu0 0.0
          %2021 = vmatprep.subr.mxu0 0.0
          %2022 = vmatpush1.msra.mxu0 0.0
          %2023 = vmatprep.subr.mxu0 0.0
          %2024 = vmatpush1.msra.mxu0 0.0
          %2025 = vmatprep.subr.mxu0 0.0
          %2026 = vmatpush1.msra.mxu0 0.0
          %2027 = vmatprep.subr.mxu0 0.0
          %2028 = vmatpush1.msra.mxu0 0.0
          %2029 = vmatprep.subr.mxu0 0.0
          %2030 = vmatpush1.msra.mxu0 0.0
          %2031 = vmatprep.subr.mxu0 0.0
          %2032 = vmatpush1.msra.mxu0 0.0
          %2033 = vmatprep.subr.mxu0 0.0
          %2034 = vmatpush1.msra.mxu0 0.0
          %2035 = vmatprep.subr.mxu0 0.0
          %2036 = vmatpush1.msra.mxu0 0.0
          %2037 = vmatprep.subr.mxu0 0.0
          %2038 = vmatpush1.msra.mxu0 0.0
          %2039 = vmatprep.subr.mxu0 0.0
          %2040 = vmatpush1.msra.mxu0 0.0
          %2041 = vmatprep.subr.mxu0 0.0
          %2042 = vmatpush1.msra.mxu0 0.0
          %2043 = vmatprep.subr.mxu0 0.0
          %2044 = vmatpush1.msra.mxu0 0.0
          %2045 = vmatprep.subr.mxu0 0.0
          %2046 = vmatpush1.msra.mxu0 0.0
          %2047 = vmatprep.subr.mxu0 0.0
          %2048 = vmatpush1.msra.mxu0 0.0
          %2049 = vmatprep.mubr.f32.mxu0 0.0
          %2050 = vmatmul.mubr.f32.gmra.mrb[0].mxu0 %v1980
          %v2051 = vpop.f32.mrb[0].mxu0
          %v2052 = vadd.f32 0.0, %v2051
          %v2053 = vpop.f32.mrb[0].mxu0
          %2054 = vdwg.mxu0
          %v2056 = vsel %vm1749, %v1742, 0
          %v2059 = vsel %vm1753, %v1031, 0
          %2061 = vmatprep.subr.mxu0 0.0
          %2062 = vmatpush1.msra.mxu0 %v2059
          %2063 = vmatprep.subr.mxu0 0.0
          %2064 = vmatpush1.msra.mxu0 0.0
          %2065 = vmatprep.subr.mxu0 0.0
          %2066 = vmatpush1.msra.mxu0 0.0
          %2067 = vmatprep.subr.mxu0 0.0
          %2068 = vmatpush1.msra.mxu0 0.0
          %2069 = vmatprep.subr.mxu0 0.0
          %2070 = vmatpush1.msra.mxu0 0.0
          %2071 = vmatprep.subr.mxu0 0.0
          %2072 = vmatpush1.msra.mxu0 0.0
          %2073 = vmatprep.subr.mxu0 0.0
          %2074 = vmatpush1.msra.mxu0 0.0
          %2075 = vmatprep.subr.mxu0 0.0
          %2076 = vmatpush1.msra.mxu0 0.0
          %2077 = vmatprep.subr.mxu0 0.0
          %2078 = vmatpush1.msra.mxu0 0.0
          %2079 = vmatprep.subr.mxu0 0.0
          %2080 = vmatpush1.msra.mxu0 0.0
          %2081 = vmatprep.subr.mxu0 0.0
          %2082 = vmatpush1.msra.mxu0 0.0
          %2083 = vmatprep.subr.mxu0 0.0
          %2084 = vmatpush1.msra.mxu0 0.0
          %2085 = vmatprep.subr.mxu0 0.0
          %2086 = vmatpush1.msra.mxu0 0.0
          %2087 = vmatprep.subr.mxu0 0.0
          %2088 = vmatpush1.msra.mxu0 0.0
          %2089 = vmatprep.subr.mxu0 0.0
          %2090 = vmatpush1.msra.mxu0 0.0
          %2091 = vmatprep.subr.mxu0 0.0
          %2092 = vmatpush1.msra.mxu0 0.0
          %2093 = vmatprep.subr.mxu0 0.0
          %2094 = vmatpush1.msra.mxu0 0.0
          %2095 = vmatprep.subr.mxu0 0.0
          %2096 = vmatpush1.msra.mxu0 0.0
          %2097 = vmatprep.subr.mxu0 0.0
          %2098 = vmatpush1.msra.mxu0 0.0
          %2099 = vmatprep.subr.mxu0 0.0
          %2100 = vmatpush1.msra.mxu0 0.0
          %2101 = vmatprep.subr.mxu0 0.0
          %2102 = vmatpush1.msra.mxu0 0.0
          %2103 = vmatprep.subr.mxu0 0.0
          %2104 = vmatpush1.msra.mxu0 0.0
          %2105 = vmatprep.subr.mxu0 0.0
          %2106 = vmatpush1.msra.mxu0 0.0
          %2107 = vmatprep.subr.mxu0 0.0
          %2108 = vmatpush1.msra.mxu0 0.0
          %2109 = vmatprep.subr.mxu0 0.0
          %2110 = vmatpush1.msra.mxu0 0.0
          %2111 = vmatprep.subr.mxu0 0.0
          %2112 = vmatpush1.msra.mxu0 0.0
          %2113 = vmatprep.subr.mxu0 0.0
          %2114 = vmatpush1.msra.mxu0 0.0
          %2115 = vmatprep.subr.mxu0 0.0
          %2116 = vmatpush1.msra.mxu0 0.0
          %2117 = vmatprep.subr.mxu0 0.0
          %2118 = vmatpush1.msra.mxu0 0.0
          %2119 = vmatprep.subr.mxu0 0.0
          %2120 = vmatpush1.msra.mxu0 0.0
          %2121 = vmatprep.subr.mxu0 0.0
          %2122 = vmatpush1.msra.mxu0 0.0
          %2123 = vmatprep.subr.mxu0 0.0
          %2124 = vmatpush1.msra.mxu0 0.0
          %2125 = vmatprep.mubr.f32.mxu0 0.0
          %2126 = vmatmul.mubr.f32.gmra.mrb[0].mxu0 %v2056
          %v2127 = vpop.f32.mrb[0].mxu0
          %v2128 = vadd.f32 0.0, %v2127
          %v2129 = vpop.f32.mrb[0].mxu0
          %2130 = vdwg.mxu0
          %v2132 = vsel %vm1749, %v1744, 0
          %v2135 = vsel %vm1753, %v1041, 0
          %2137 = vmatprep.subr.mxu0 0.0
          %2138 = vmatpush1.msra.mxu0 %v2135
          %2139 = vmatprep.subr.mxu0 0.0
          %2140 = vmatpush1.msra.mxu0 0.0
          %2141 = vmatprep.subr.mxu0 0.0
          %2142 = vmatpush1.msra.mxu0 0.0
          %2143 = vmatprep.subr.mxu0 0.0
          %2144 = vmatpush1.msra.mxu0 0.0
          %2145 = vmatprep.subr.mxu0 0.0
          %2146 = vmatpush1.msra.mxu0 0.0
          %2147 = vmatprep.subr.mxu0 0.0
          %2148 = vmatpush1.msra.mxu0 0.0
          %2149 = vmatprep.subr.mxu0 0.0
          %2150 = vmatpush1.msra.mxu0 0.0
          %2151 = vmatprep.subr.mxu0 0.0
          %2152 = vmatpush1.msra.mxu0 0.0
          %2153 = vmatprep.subr.mxu0 0.0
          %2154 = vmatpush1.msra.mxu0 0.0
          %2155 = vmatprep.subr.mxu0 0.0
          %2156 = vmatpush1.msra.mxu0 0.0
          %2157 = vmatprep.subr.mxu0 0.0
          %2158 = vmatpush1.msra.mxu0 0.0
          %2159 = vmatprep.subr.mxu0 0.0
          %2160 = vmatpush1.msra.mxu0 0.0
          %2161 = vmatprep.subr.mxu0 0.0
          %2162 = vmatpush1.msra.mxu0 0.0
          %2163 = vmatprep.subr.mxu0 0.0
          %2164 = vmatpush1.msra.mxu0 0.0
          %2165 = vmatprep.subr.mxu0 0.0
          %2166 = vmatpush1.msra.mxu0 0.0
          %2167 = vmatprep.subr.mxu0 0.0
          %2168 = vmatpush1.msra.mxu0 0.0
          %2169 = vmatprep.subr.mxu0 0.0
          %2170 = vmatpush1.msra.mxu0 0.0
          %2171 = vmatprep.subr.mxu0 0.0
          %2172 = vmatpush1.msra.mxu0 0.0
          %2173 = vmatprep.subr.mxu0 0.0
          %2174 = vmatpush1.msra.mxu0 0.0
          %2175 = vmatprep.subr.mxu0 0.0
          %2176 = vmatpush1.msra.mxu0 0.0
          %2177 = vmatprep.subr.mxu0 0.0
          %2178 = vmatpush1.msra.mxu0 0.0
          %2179 = vmatprep.subr.mxu0 0.0
          %2180 = vmatpush1.msra.mxu0 0.0
          %2181 = vmatprep.subr.mxu0 0.0
          %2182 = vmatpush1.msra.mxu0 0.0
          %2183 = vmatprep.subr.mxu0 0.0
          %2184 = vmatpush1.msra.mxu0 0.0
          %2185 = vmatprep.subr.mxu0 0.0
          %2186 = vmatpush1.msra.mxu0 0.0
          %2187 = vmatprep.subr.mxu0 0.0
          %2188 = vmatpush1.msra.mxu0 0.0
          %2189 = vmatprep.subr.mxu0 0.0
          %2190 = vmatpush1.msra.mxu0 0.0
          %2191 = vmatprep.subr.mxu0 0.0
          %2192 = vmatpush1.msra.mxu0 0.0
          %2193 = vmatprep.subr.mxu0 0.0
          %2194 = vmatpush1.msra.mxu0 0.0
          %2195 = vmatprep.subr.mxu0 0.0
          %2196 = vmatpush1.msra.mxu0 0.0
          %2197 = vmatprep.subr.mxu0 0.0
          %2198 = vmatpush1.msra.mxu0 0.0
          %2199 = vmatprep.subr.mxu0 0.0
          %2200 = vmatpush1.msra.mxu0 0.0
          %2201 = vmatprep.mubr.f32.mxu0 0.0
          %2202 = vmatmul.mubr.f32.gmra.mrb[0].mxu0 %v2132
          %v2203 = vpop.f32.mrb[0].mxu0
          %v2204 = vadd.f32 0.0, %v2203
          %v2205 = vpop.f32.mrb[0].mxu0
          %2206 = vdwg.mxu0
          %v2208 = vsel %vm1749, %v1746, 0
          %v2211 = vsel %vm1753, %v1038, 0
          %2213 = vmatprep.subr.mxu0 0.0
          %2214 = vmatpush1.msra.mxu0 %v2211
          %2215 = vmatprep.subr.mxu0 0.0
          %2216 = vmatpush1.msra.mxu0 0.0
          %2217 = vmatprep.subr.mxu0 0.0
          %2218 = vmatpush1.msra.mxu0 0.0
          %2219 = vmatprep.subr.mxu0 0.0
          %2220 = vmatpush1.msra.mxu0 0.0
          %2221 = vmatprep.subr.mxu0 0.0
          %2222 = vmatpush1.msra.mxu0 0.0
          %2223 = vmatprep.subr.mxu0 0.0
          %2224 = vmatpush1.msra.mxu0 0.0
          %2225 = vmatprep.subr.mxu0 0.0
          %2226 = vmatpush1.msra.mxu0 0.0
          %2227 = vmatprep.subr.mxu0 0.0
          %2228 = vmatpush1.msra.mxu0 0.0
          %2229 = vmatprep.subr.mxu0 0.0
          %2230 = vmatpush1.msra.mxu0 0.0
          %2231 = vmatprep.subr.mxu0 0.0
          %2232 = vmatpush1.msra.mxu0 0.0
          %2233 = vmatprep.subr.mxu0 0.0
          %2234 = vmatpush1.msra.mxu0 0.0
          %2235 = vmatprep.subr.mxu0 0.0
          %2236 = vmatpush1.msra.mxu0 0.0
          %2237 = vmatprep.subr.mxu0 0.0
          %2238 = vmatpush1.msra.mxu0 0.0
          %2239 = vmatprep.subr.mxu0 0.0
          %2240 = vmatpush1.msra.mxu0 0.0
          %2241 = vmatprep.subr.mxu0 0.0
          %2242 = vmatpush1.msra.mxu0 0.0
          %2243 = vmatprep.subr.mxu0 0.0
          %2244 = vmatpush1.msra.mxu0 0.0
          %2245 = vmatprep.subr.mxu0 0.0
          %2246 = vmatpush1.msra.mxu0 0.0
          %2247 = vmatprep.subr.mxu0 0.0
          %2248 = vmatpush1.msra.mxu0 0.0
          %2249 = vmatprep.subr.mxu0 0.0
          %2250 = vmatpush1.msra.mxu0 0.0
          %2251 = vmatprep.subr.mxu0 0.0
          %2252 = vmatpush1.msra.mxu0 0.0
          %2253 = vmatprep.subr.mxu0 0.0
          %2254 = vmatpush1.msra.mxu0 0.0
          %2255 = vmatprep.subr.mxu0 0.0
          %2256 = vmatpush1.msra.mxu0 0.0
          %2257 = vmatprep.subr.mxu0 0.0
          %2258 = vmatpush1.msra.mxu0 0.0
          %2259 = vmatprep.subr.mxu0 0.0
          %2260 = vmatpush1.msra.mxu0 0.0
          %2261 = vmatprep.subr.mxu0 0.0
          %2262 = vmatpush1.msra.mxu0 0.0
          %2263 = vmatprep.subr.mxu0 0.0
          %2264 = vmatpush1.msra.mxu0 0.0
          %2265 = vmatprep.subr.mxu0 0.0
          %2266 = vmatpush1.msra.mxu0 0.0
          %2267 = vmatprep.subr.mxu0 0.0
          %2268 = vmatpush1.msra.mxu0 0.0
          %2269 = vmatprep.subr.mxu0 0.0
          %2270 = vmatpush1.msra.mxu0 0.0
          %2271 = vmatprep.subr.mxu0 0.0
          %2272 = vmatpush1.msra.mxu0 0.0
          %2273 = vmatprep.subr.mxu0 0.0
          %2274 = vmatpush1.msra.mxu0 0.0
          %2275 = vmatprep.subr.mxu0 0.0
          %2276 = vmatpush1.msra.mxu0 0.0
          %2277 = vmatprep.mubr.f32.mxu0 0.0
          %2278 = vmatmul.mubr.f32.gmra.mrb[0].mxu0 %v2208
          %v2279 = vpop.f32.mrb[0].mxu0
          %v2280 = vadd.f32 0.0, %v2279
          %v2281 = vpop.f32.mrb[0].mxu0
          %2282 = vdwg.mxu0
          %v2284 = vsel %vm1749, %v1748, 0
          %v2287 = vsel %vm1753, %v1042, 0
          %2289 = vmatprep.subr.mxu0 0.0
          %2290 = vmatpush1.msra.mxu0 %v2287
          %2291 = vmatprep.subr.mxu0 0.0
          %2292 = vmatpush1.msra.mxu0 0.0
          %2293 = vmatprep.subr.mxu0 0.0
          %2294 = vmatpush1.msra.mxu0 0.0
          %2295 = vmatprep.subr.mxu0 0.0
          %2296 = vmatpush1.msra.mxu0 0.0
          %2297 = vmatprep.subr.mxu0 0.0
          %2298 = vmatpush1.msra.mxu0 0.0
          %2299 = vmatprep.subr.mxu0 0.0
          %2300 = vmatpush1.msra.mxu0 0.0
          %2301 = vmatprep.subr.mxu0 0.0
          %2302 = vmatpush1.msra.mxu0 0.0
          %2303 = vmatprep.subr.mxu0 0.0
          %2304 = vmatpush1.msra.mxu0 0.0
          %2305 = vmatprep.subr.mxu0 0.0
          %2306 = vmatpush1.msra.mxu0 0.0
          %2307 = vmatprep.subr.mxu0 0.0
          %2308 = vmatpush1.msra.mxu0 0.0
          %2309 = vmatprep.subr.mxu0 0.0
          %2310 = vmatpush1.msra.mxu0 0.0
          %2311 = vmatprep.subr.mxu0 0.0
          %2312 = vmatpush1.msra.mxu0 0.0
          %2313 = vmatprep.subr.mxu0 0.0
          %2314 = vmatpush1.msra.mxu0 0.0
          %2315 = vmatprep.subr.mxu0 0.0
          %2316 = vmatpush1.msra.mxu0 0.0
          %2317 = vmatprep.subr.mxu0 0.0
          %2318 = vmatpush1.msra.mxu0 0.0
          %2319 = vmatprep.subr.mxu0 0.0
          %2320 = vmatpush1.msra.mxu0 0.0
          %2321 = vmatprep.subr.mxu0 0.0
          %2322 = vmatpush1.msra.mxu0 0.0
          %2323 = vmatprep.subr.mxu0 0.0
          %2324 = vmatpush1.msra.mxu0 0.0
          %2325 = vmatprep.subr.mxu0 0.0
          %2326 = vmatpush1.msra.mxu0 0.0
          %2327 = vmatprep.subr.mxu0 0.0
          %2328 = vmatpush1.msra.mxu0 0.0
          %2329 = vmatprep.subr.mxu0 0.0
          %2330 = vmatpush1.msra.mxu0 0.0
          %2331 = vmatprep.subr.mxu0 0.0
          %2332 = vmatpush1.msra.mxu0 0.0
          %2333 = vmatprep.subr.mxu0 0.0
          %2334 = vmatpush1.msra.mxu0 0.0
          %2335 = vmatprep.subr.mxu0 0.0
          %2336 = vmatpush1.msra.mxu0 0.0
          %2337 = vmatprep.subr.mxu0 0.0
          %2338 = vmatpush1.msra.mxu0 0.0
          %2339 = vmatprep.subr.mxu0 0.0
          %2340 = vmatpush1.msra.mxu0 0.0
          %2341 = vmatprep.subr.mxu0 0.0
          %2342 = vmatpush1.msra.mxu0 0.0
          %2343 = vmatprep.subr.mxu0 0.0
          %2344 = vmatpush1.msra.mxu0 0.0
          %2345 = vmatprep.subr.mxu0 0.0
          %2346 = vmatpush1.msra.mxu0 0.0
          %2347 = vmatprep.subr.mxu0 0.0
          %2348 = vmatpush1.msra.mxu0 0.0
          %2349 = vmatprep.subr.mxu0 0.0
          %2350 = vmatpush1.msra.mxu0 0.0
          %2351 = vmatprep.subr.mxu0 0.0
          %2352 = vmatpush1.msra.mxu0 0.0
          %2353 = vmatprep.mubr.f32.mxu0 0.0
          %2354 = vmatmul.mubr.f32.gmra.mrb[0].mxu0 %v2284
          %v2355 = vpop.f32.mrb[0].mxu0
          %v2356 = vadd.f32 0.0, %v2355
          %v2357 = vpop.f32.mrb[0].mxu0
          %2358 = vdwg.mxu0
          %v2359 = vcombine.low %v1824, %v1976
          %v2361 = vunpack.c.l.s4 1983009808
          %v2362 = vunpack.c.0.s8 %v2361
          %v2363 = vlaneseq
          %v2364 = vshrl.u32 %v2363, 7
          %v2365 = vsub.s32 %v2362, %v2364
          %v2366 = vrot.slane %v2359, %v2365
          %v2367 = vcombine.low %v1900, %v2052
          %v2369 = vunpack.c.l.s4 1983009808
          %v2370 = vunpack.c.0.s8 %v2369
          %v2371 = vlaneseq
          %v2372 = vshrl.u32 %v2371, 7
          %v2373 = vsub.s32 %v2370, %v2372
          %v2374 = vrot.slane %v2367, %v2373
          %v2375 = vcombine.low %v2128, %v2280
          %v2377 = vunpack.c.l.s4 1983009808
          %v2378 = vunpack.c.0.s8 %v2377
          %v2379 = vlaneseq
          %v2380 = vshrl.u32 %v2379, 7
          %v2381 = vsub.s32 %v2378, %v2380
          %v2382 = vrot.slane %v2375, %v2381
          %v2383 = vcombine.low %v2204, %v2356
          %v2385 = vunpack.c.l.s4 1983009808
          %v2386 = vunpack.c.0.s8 %v2385
          %v2387 = vlaneseq
          %v2388 = vshrl.u32 %v2387, 7
          %v2389 = vsub.s32 %v2386, %v2388
          %v2390 = vrot.slane %v2383, %v2389
          %v2391 = vcombine.low %v2366, %v2374
          %v2392 = vcombine.high %v2366, %v2374
          %v2394 = vunpack.c.l.s4 1934713408
          %v2395 = vunpack.c.0.s8 %v2394
          %v2396 = vlaneseq
          %v2397 = vshrl.u32 %v2396, 7
          %v2398 = vsub.s32 %v2395, %v2397
          %v2399 = vrot.slane %v2391, %v2398
          %v2401 = vunpack.c.l.s4 1934713408
          %v2402 = vunpack.c.0.s8 %v2401
          %v2403 = vlaneseq
          %v2404 = vshrl.u32 %v2403, 7
          %v2405 = vsub.s32 %v2402, %v2404
          %v2406 = vrot.slane %v2392, %v2405
          %v2407 = vcombine.low %v2382, %v2390
          %v2408 = vcombine.high %v2382, %v2390
          %v2410 = vunpack.c.l.s4 1934713408
          %v2411 = vunpack.c.0.s8 %v2410
          %v2412 = vlaneseq
          %v2413 = vshrl.u32 %v2412, 7
          %v2414 = vsub.s32 %v2411, %v2413
          %v2415 = vrot.slane %v2407, %v2414
          %v2417 = vunpack.c.l.s4 1934713408
          %v2418 = vunpack.c.0.s8 %v2417
          %v2419 = vlaneseq
          %v2420 = vshrl.u32 %v2419, 7
          %v2421 = vsub.s32 %v2418, %v2420
          %v2422 = vrot.slane %v2408, %v2421
          %v2423 = vcombine.low %v2399, %v2415
          %v2424 = vcombine.high %v2399, %v2415
          %v2425 = vcombine.low %v2406, %v2422
          %v2426 = vcombine.high %v2406, %v2422
          %2428 = vrot.lane.b32.xlu0 %v2424, 32
          %v2429 = vpop.permute.xlu0 %2428
          %2432 = vrot.lane.b32.xlu0 %v2425, 64
          %v2433 = vpop.permute.xlu0 %2432
          %2436 = vrot.lane.b32.xlu0 %v2426, 96
          %v2437 = vpop.permute.xlu0 %2436
          %v2439 = vsel %vm1043, %v2423, %v2429
          %vm2440 = vcmask 523264
          %v2441 = vsel %vm2440, %v2439, %v2433
          %vm2442 = vcmask 785408
          %v2443 = vsel %vm2442, %v2441, %v2437
          %v2444 = vpack.c.bf16 %v2443, %v2443
          %v2445 = vld [vmem:[%s437] sm:$0xf]
          %v2446 = vld [vmem:[%s437 + $0x4] sm:$0xf]
          %v2447 = vld [vmem:[%s437 + $0x8] sm:$0xf]
          %v2448 = vld [vmem:[%s437 + $0xc] sm:$0xf]
          %v2449 = vld [vmem:[%s437 + $0x10] sm:$0xf]
          %v2450 = vld [vmem:[%s437 + $0x14] sm:$0xf]
          %v2451 = vld [vmem:[%s437 + $0x18] sm:$0xf]
          %v2452 = vld [vmem:[%s437 + $0x1c] sm:$0xf]
          %v2453 = vld [vmem:[%s437 + $0x20] sm:$0xf]
          %v2454 = vld [vmem:[%s437 + $0x24] sm:$0xf]
          %v2455 = vld [vmem:[%s437 + $0x28] sm:$0xf]
          %v2456 = vld [vmem:[%s437 + $0x2c] sm:$0xf]
          %v2457 = vld [vmem:[%s437 + $0x30] sm:$0xf]
          %v2458 = vld [vmem:[%s437 + $0x34] sm:$0xf]
          %v2459 = vld [vmem:[%s437 + $0x38] sm:$0xf]
          %v2460 = vld [vmem:[%s437 + $0x3c] sm:$0xf]
          %v2461 = vld [vmem:[%s520] sm:$0x1]
          %v2463 = vlaneseq
          %v2464 = vshrl.u32 %v2463, 7
          %v2465 = vsub.s32 0, %v2464
          %v2466 = vrot.slane %v2461, %v2465
          %v2484 = vunpack.c.l.b16 %v2445
          %v2485 = vunpack.c.l.b16 %v2446
          %v2486 = vunpack.c.l.b16 %v2447
          %v2487 = vunpack.c.l.b16 %v2448
          %v2488 = vunpack.c.l.b16 %v2449
          %v2489 = vunpack.c.l.b16 %v2450
          %v2490 = vunpack.c.l.b16 %v2451
          %v2491 = vunpack.c.l.b16 %v2452
          %v2492 = vunpack.c.l.b16 %v2453
          %v2493 = vunpack.c.l.b16 %v2454
          %v2494 = vunpack.c.l.b16 %v2455
          %v2495 = vunpack.c.l.b16 %v2456
          %v2496 = vunpack.c.l.b16 %v2457
          %v2497 = vunpack.c.l.b16 %v2458
          %v2498 = vunpack.c.l.b16 %v2459
          %v2499 = vunpack.c.l.b16 %v2460
          %v2500 = vpack.c.b16 %v2485, %v2484
          %v2501 = vpack.c.b16 %v2487, %v2486
          %v2502 = vpack.c.b16 %v2489, %v2488
          %v2503 = vpack.c.b16 %v2491, %v2490
          %v2504 = vpack.c.b16 %v2493, %v2492
          %v2505 = vpack.c.b16 %v2495, %v2494
          %v2506 = vpack.c.b16 %v2497, %v2496
          %v2507 = vpack.c.b16 %v2499, %v2498
          %2516 = vmatprep.subr.bf16.mxu0 0
          %2517 = vmatpush1.bf16.msra.mxu0 %v2500
          %2518 = vmatprep.subr.bf16.mxu0 0
          %2519 = vmatpush1.bf16.msra.mxu0 %v2501
          %2520 = vmatprep.subr.bf16.mxu0 0
          %2521 = vmatpush1.bf16.msra.mxu0 %v2502
          %2522 = vmatprep.subr.bf16.mxu0 0
          %2523 = vmatpush1.bf16.msra.mxu0 %v2503
          %2524 = vmatprep.subr.bf16.mxu0 0
          %2525 = vmatpush1.bf16.msra.mxu0 %v2504
          %2526 = vmatprep.subr.bf16.mxu0 0
          %2527 = vmatpush1.bf16.msra.mxu0 %v2505
          %2528 = vmatprep.subr.bf16.mxu0 0
          %2529 = vmatpush1.bf16.msra.mxu0 %v2506
          %2530 = vmatprep.subr.bf16.mxu0 0
          %2531 = vmatpush1.bf16.msra.mxu0 %v2507
          %2532 = vmatprep.subr.bf16.mxu0 0
          %2533 = vmatpush1.bf16.msra.mxu0 0
          %2534 = vmatprep.subr.bf16.mxu0 0
          %2535 = vmatpush1.bf16.msra.mxu0 0
          %2536 = vmatprep.subr.bf16.mxu0 0
          %2537 = vmatpush1.bf16.msra.mxu0 0
          %2538 = vmatprep.subr.bf16.mxu0 0
          %2539 = vmatpush1.bf16.msra.mxu0 0
          %2540 = vmatprep.subr.bf16.mxu0 0
          %2541 = vmatpush1.bf16.msra.mxu0 0
          %2542 = vmatprep.subr.bf16.mxu0 0
          %2543 = vmatpush1.bf16.msra.mxu0 0
          %2544 = vmatprep.subr.bf16.mxu0 0
          %2545 = vmatpush1.bf16.msra.mxu0 0
          %2546 = vmatprep.subr.bf16.mxu0 0
          %2547 = vmatpush1.bf16.msra.mxu0 0
          %2548 = vmatprep.mubr.bf16.mxu0 0
          %2549 = vmatmul.mubr.bf16.gmra.mrb[0].mxu0 %v2444
          %v2550 = vpop.f32.mrb[0].mxu0
          %v2551 = vadd.f32 %v2466, %v2550
          %v2552 = vpop.f32.mrb[0].mxu0
          %v2553 = vpop.f32.mrb[0].mxu0
          %v2554 = vpop.f32.mrb[0].mxu0
          %2555 = vdwg.mxu0
          %2556 = vst [vmem:[#allocation2] sm:$0xff] %v2551
        $region72: #{tpu_custom_call.1} parent=47 // pred_fallthru
          _
        %p2557 = scmp.ge.s32.totalorder %s33, 2
        // Predicated region
        $region73: #{tpu_custom_call.1} parent=47 // pred_check
          %p2558 = pneg %p2557
        $region74: #{tpu_custom_call.1} parent=47 // pred_check_branch
          %2560 = sbr.rel (%p2558) target = $region76
        $region75: #{tpu_custom_call.1} parent=47 // pred_region
          %v2561 = vld [vmem:[#allocation2] sm:$0xff]
          %v2562 = vpack.c.bf16 %v2561, %v2561
          %v2563 = vld [vmem:[%s446] sm:$0xf]
          %v2564 = vld [vmem:[%s446 + $0x4] sm:$0xf]
          %v2565 = vld [vmem:[%s446 + $0x8] sm:$0xf]
          %v2566 = vld [vmem:[%s446 + $0xc] sm:$0xf]
          %v2567 = vld [vmem:[%s446 + $0x10] sm:$0xf]
          %v2568 = vld [vmem:[%s446 + $0x14] sm:$0xf]
          %v2569 = vld [vmem:[%s446 + $0x18] sm:$0xf]
          %v2570 = vld [vmem:[%s446 + $0x1c] sm:$0xf]
          %v2571 = vld [vmem:[%s446 + $0x20] sm:$0xf]
          %v2572 = vld [vmem:[%s446 + $0x24] sm:$0xf]
          %v2573 = vld [vmem:[%s446 + $0x28] sm:$0xf]
          %v2574 = vld [vmem:[%s446 + $0x2c] sm:$0xf]
          %v2575 = vld [vmem:[%s446 + $0x30] sm:$0xf]
          %v2576 = vld [vmem:[%s446 + $0x34] sm:$0xf]
          %v2577 = vld [vmem:[%s446 + $0x38] sm:$0xf]
          %v2578 = vld [vmem:[%s446 + $0x3c] sm:$0xf]
          %v2579 = vld [vmem:[%s531] sm:$0x1]
          %v2581 = vlaneseq
          %v2582 = vshrl.u32 %v2581, 7
          %v2583 = vsub.s32 0, %v2582
          %v2584 = vrot.slane %v2579, %v2583
          %v2602 = vunpack.c.l.b16 %v2563
          %v2603 = vunpack.c.l.b16 %v2564
          %v2604 = vunpack.c.l.b16 %v2565
          %v2605 = vunpack.c.l.b16 %v2566
          %v2606 = vunpack.c.l.b16 %v2567
          %v2607 = vunpack.c.l.b16 %v2568
          %v2608 = vunpack.c.l.b16 %v2569
          %v2609 = vunpack.c.l.b16 %v2570
          %v2610 = vunpack.c.l.b16 %v2571
          %v2611 = vunpack.c.l.b16 %v2572
          %v2612 = vunpack.c.l.b16 %v2573
          %v2613 = vunpack.c.l.b16 %v2574
          %v2614 = vunpack.c.l.b16 %v2575
          %v2615 = vunpack.c.l.b16 %v2576
          %v2616 = vunpack.c.l.b16 %v2577
          %v2617 = vunpack.c.l.b16 %v2578
          %v2618 = vpack.c.b16 %v2603, %v2602
          %v2619 = vpack.c.b16 %v2605, %v2604
          %v2620 = vpack.c.b16 %v2607, %v2606
          %v2621 = vpack.c.b16 %v2609, %v2608
          %v2622 = vpack.c.b16 %v2611, %v2610
          %v2623 = vpack.c.b16 %v2613, %v2612
          %v2624 = vpack.c.b16 %v2615, %v2614
          %v2625 = vpack.c.b16 %v2617, %v2616
          %2634 = vmatprep.subr.bf16.mxu0 0
          %2635 = vmatpush1.bf16.msra.mxu0 %v2618
          %2636 = vmatprep.subr.bf16.mxu0 0
          %2637 = vmatpush1.bf16.msra.mxu0 %v2619
          %2638 = vmatprep.subr.bf16.mxu0 0
          %2639 = vmatpush1.bf16.msra.mxu0 %v2620
          %2640 = vmatprep.subr.bf16.mxu0 0
          %2641 = vmatpush1.bf16.msra.mxu0 %v2621
          %2642 = vmatprep.subr.bf16.mxu0 0
          %2643 = vmatpush1.bf16.msra.mxu0 %v2622
          %2644 = vmatprep.subr.bf16.mxu0 0
          %2645 = vmatpush1.bf16.msra.mxu0 %v2623
          %2646 = vmatprep.subr.bf16.mxu0 0
          %2647 = vmatpush1.bf16.msra.mxu0 %v2624
          %2648 = vmatprep.subr.bf16.mxu0 0
          %2649 = vmatpush1.bf16.msra.mxu0 %v2625
          %2650 = vmatprep.subr.bf16.mxu0 0
          %2651 = vmatpush1.bf16.msra.mxu0 0
          %2652 = vmatprep.subr.bf16.mxu0 0
          %2653 = vmatpush1.bf16.msra.mxu0 0
          %2654 = vmatprep.subr.bf16.mxu0 0
          %2655 = vmatpush1.bf16.msra.mxu0 0
          %2656 = vmatprep.subr.bf16.mxu0 0
          %2657 = vmatpush1.bf16.msra.mxu0 0
          %2658 = vmatprep.subr.bf16.mxu0 0
          %2659 = vmatpush1.bf16.msra.mxu0 0
          %2660 = vmatprep.subr.bf16.mxu0 0
          %2661 = vmatpush1.bf16.msra.mxu0 0
          %2662 = vmatprep.subr.bf16.mxu0 0
          %2663 = vmatpush1.bf16.msra.mxu0 0
          %2664 = vmatprep.subr.bf16.mxu0 0
          %2665 = vmatpush1.bf16.msra.mxu0 0
          %2666 = vmatprep.mubr.bf16.mxu0 0
          %2667 = vmatmul.mubr.bf16.gmra.mrb[0].mxu0 %v2562
          %v2668 = vpop.f32.mrb[0].mxu0
          %v2669 = vadd.f32 %v2584, %v2668
          %v2670 = vpop.f32.mrb[0].mxu0
          %v2671 = vpop.f32.mrb[0].mxu0
          %v2672 = vpop.f32.mrb[0].mxu0
          %2673 = vdwg.mxu0
          %2674 = vst [vmem:[%s503] sm:$0xff] %v2669
        $region76: #{tpu_custom_call.1} parent=47 // pred_fallthru
          _
        %s2675 = sand.u32 %s266, 1
        %s2676 = scalar_lea.sflag [#allocation5], %s2675
        %s2677 = sand.u32 %s266, 1
        %s2678 = smul.addr %s2677, 8
        %s2679 = scalar_lea.vmem [#allocation11], %s2678
        // Predicated region
        $region77: #{tpu_custom_call.1} parent=47 // pred_check
          %p2680 = pneg %p276
        $region78: #{tpu_custom_call.1} parent=47 // pred_check_branch
          %2682 = sbr.rel (%p2680) target = $region80
        $region79: #{tpu_custom_call.1} parent=47 // pred_region
          %s2683 = ssub.s32 %s33, 2
          %p2684 = scmp.gt.s32.totalorder %s2683, 0
          %s2685 = scalar_select %p2684, %s2683, 0
          %s2687 = ssub.s32 128, 128
          %2688 = vsyncadd %s2676, %s2687
          %s2689 = sadd.s32 %s2685, %s32
          %s2690 = smul.addr %s2689, 128
          %s2691 = scalar_lea.hbm %s7, %s2690
          %s2693 = sshll.u32 %s2679, 4
          %s2694 = int_to_ptr.vmem [resolvable:$true] %s2693
          %2696 = dma.vmem_to_hbm [thread:$0]  %s2694, 128, %s2691, %s2676
        $region80: #{tpu_custom_call.1} parent=47 // pred_fallthru
          _
      $region48: #{tpu_custom_call.1} parent=5 // pred_fallthru
        _
      %p2697 = scmp.le.s32.totalorder 2, %s23
      // Predicated region
      $region81: #{tpu_custom_call.1} parent=5 // pred_check
        %p2698 = pneg %p2697
      $region82: #{tpu_custom_call.1} parent=5 // pred_check_branch
        %2700 = sbr.rel (%p2698) target = $region84
      $region83: #{tpu_custom_call.1} parent=5 // pred_region
        %s2701 = ssub.s32 %s23, 2
        // Predicated region
        $region85: #{tpu_custom_call.1} parent=83 // pred_check
          %p2702 = pneg %p282
        $region86: #{tpu_custom_call.1} parent=83 // pred_check_branch
          %2704 = sbr.rel (%p2702) target = $region88
        $region87: #{tpu_custom_call.1} parent=83 // pred_region
          %s2705 = sand.u32 %s267, 1
          %s2706 = scalar_lea.sflag [#allocation5], %s2705
          %s2707 = sand.u32 %s267, 1
          %s2708 = smul.addr %s2707, 8
          %s2709 = scalar_lea.vmem [#allocation11], %s2708
          %2710 = dma.done %s2706, 128
        $region88: #{tpu_custom_call.1} parent=83 // pred_fallthru
          _
      $region84: #{tpu_custom_call.1} parent=5 // pred_fallthru
        _
    $region6: #{tpu_custom_call.1} parent=1 // loop_footer
      %s27 = sadd.s32 1, %s23
    $region7: #{tpu_custom_call.1} parent=1 // loop_footer_branch
      %22 = sbr.rel target = $region3
    $region8: #{tpu_custom_call.1} parent=1 // loop_exit
      _
    %2711 = vsyncpa [#allocation4], 1
    %s2712 = scalar_lea.sflag [#allocation4], 1
    %2713 = vsyncpa %s2712, 1
    %2714 = vsyncpa [#allocation7], 1
    %s2715 = scalar_lea.sflag [#allocation7], 1
    %2716 = vsyncpa %s2715, 1
    %2717 = vsyncpa [#allocation10], 1
    %s2718 = scalar_lea.sflag [#allocation10], 1
    %2719 = vsyncpa %s2718, 1
    %2720 = vsyncpa [#allocation5], 1
    %s2721 = scalar_lea.sflag [#allocation5], 1
    %2722 = vsyncpa %s2721, 1

</llo_original>
